<compile_context>
chip_gen: v5e
topology: v5e:2x2
jax: 0.10.0
libtpu: 0.0.40
codegen_flags: <defaults>
</compile_context>

<pallas_src>
import functools

import jax
import jax.numpy as jnp
from jax.experimental import pallas as pl
from jax.experimental.pallas import tpu as pltpu


C_IN, C_STEM, C_EXP, C_SE, C_OUT, C_PAD = 3, 32, 128, 8, 64, 128

_MOSAIC_PARAMS = pltpu.CompilerParams(
    dimension_semantics=("parallel",),          # split the 1-D grid across TCs
    vmem_limit_bytes=32 * 1024 * 1024,          # safe on v5e/v6e/v7x
)


# ----------------------------------------------------------------------------
# Kernel A: stem 3x3/s2 conv (as matmul) + BN + SiLU  ->  expand 1x1 + BN + SiLU
# ----------------------------------------------------------------------------
def _stem_expand_kernel(p_ref, sw_ref, ss_ref, sb_ref, ew_ref, es_ref, eb_ref,
                        x0_ref, xe_ref):
    # stem matmul: bf16 operands, f32 accumulation; BN/SiLU in f32 (VPU).
    h = jnp.dot(p_ref[...], sw_ref[...], preferred_element_type=jnp.float32)
    h = h * ss_ref[...] + sb_ref[...]
    h = h * jax.nn.sigmoid(h)                               # SiLU
    x0_ref[...] = h                                         # residual (small)
    # expand 1x1, fused so the 32-lane stem activation never hits HBM.
    e = jnp.dot(h.astype(jnp.bfloat16), ew_ref[...],
                preferred_element_type=jnp.float32)
    e = e * es_ref[...] + eb_ref[...]
    e = e * jax.nn.sigmoid(e)                               # SiLU
    xe_ref[...] = e.astype(jnp.bfloat16)                    # lane-dense bf16


def stem_expand(patches, stem_w, stem_s, stem_b, exp_w, exp_s, exp_b):
    M, K = patches.shape
    tm = 512 if M >= 512 else M                             # rows per tile
    grid = (pl.cdiv(M, tm),)
    return pl.pallas_call(
        _stem_expand_kernel,
        out_shape=(jax.ShapeDtypeStruct((M, C_STEM), jnp.float32),
                   jax.ShapeDtypeStruct((M, C_EXP), jnp.bfloat16)),
        grid=grid,
        in_specs=[
            pl.BlockSpec((tm, K), lambda i: (i, 0)),
            pl.BlockSpec((K, C_STEM), lambda i: (0, 0)),
            pl.BlockSpec((1, C_STEM), lambda i: (0, 0)),
            pl.BlockSpec((1, C_STEM), lambda i: (0, 0)),
            pl.BlockSpec((C_STEM, C_EXP), lambda i: (0, 0)),
            pl.BlockSpec((1, C_EXP), lambda i: (0, 0)),
            pl.BlockSpec((1, C_EXP), lambda i: (0, 0)),
        ],
        out_specs=(pl.BlockSpec((tm, C_STEM), lambda i: (i, 0)),
                   pl.BlockSpec((tm, C_EXP), lambda i: (i, 0))),
        compiler_params=_MOSAIC_PARAMS,
    )(patches, stem_w, stem_s, stem_b, exp_w, exp_s, exp_b)


# ----------------------------------------------------------------------------
# Kernel B: fused MBConv tail + head (per batch element)
#   depthwise 3x3 + BN + SiLU -> SE -> project 1x1 + BN + residual
#   -> head 1x1 + BN + SiLU (channels zero-padded to 128 lanes)
# ----------------------------------------------------------------------------
def _mbconv_head_kernel(xe_ref, x0_ref, dww_ref, dws_ref, dwb_ref,
                        sw1_ref, sb1_ref, sw2_ref, sb2_ref,
                        pw_ref, ps_ref, pb_ref,
                        hw_ref, hs_ref, hb_ref,
                        o_ref, *, Ho, Wo, Wp):
    C = xe_ref.shape[-1]
    val = xe_ref[0].astype(jnp.float32)                     # (Hp, Wp, C), f32 VPU math
    dww = dww_ref[...]                                      # (9, C)

    # 3x3 depthwise conv, stride 1, input spatially pre-padded.
    # W shift = XLU roll + aligned [:Wo] slice; H shift = outer-dim slice.
    acc = jnp.zeros((Ho, Wo, C), jnp.float32)
    for dj in range(3):
        shifted = val if dj == 0 else pltpu.roll(val, shift=Wp - dj, axis=1)
        for di in range(3):
            acc = acc + shifted[di:di + Ho, :Wo, :] * dww[di * 3 + dj]
    y = acc * dws_ref[0] + dwb_ref[0]
    y = y * jax.nn.sigmoid(y)                               # SiLU
    ym = y.reshape(Ho * Wo, C)                              # Wo % 8 == 0 -> cheap

    # Squeeze-and-Excitation (hidden dim zero-padded to 128 lanes; exact).
    pooled = jnp.mean(ym, axis=0, keepdims=True)            # (1, C)
    h = jnp.dot(pooled.astype(jnp.bfloat16), sw1_ref[...],
                preferred_element_type=jnp.float32) + sb1_ref[...]
    h = h * jax.nn.sigmoid(h)                               # SiLU
    g = jnp.dot(h.astype(jnp.bfloat16), sw2_ref[...],
                preferred_element_type=jnp.float32) + sb2_ref[...]
    g = jax.nn.sigmoid(g)                                   # gate (1, C)
    ys = ym * g

    # 1x1 project conv + folded BN + residual add (all in VMEM).
    pj = jnp.dot(ys.astype(jnp.bfloat16), pw_ref[...],
                 preferred_element_type=jnp.float32)
    pj = pj * ps_ref[...] + pb_ref[...] + x0_ref[0]

    # head 1x1 conv + BN + SiLU; output channels zero-padded to 128 lanes.
    z = jnp.dot(pj.astype(jnp.bfloat16), hw_ref[...],
                preferred_element_type=jnp.float32)
    z = z * hs_ref[...] + hb_ref[...]
    o_ref[0] = z * jax.nn.sigmoid(z)


def mbconv_head(xe_pad, x0, p, Ho, Wo):
    N, Hp, Wp, C = xe_pad.shape
    HW = Ho * Wo
    kern = functools.partial(_mbconv_head_kernel, Ho=Ho, Wo=Wo, Wp=Wp)
    full = lambda n: (0, 0)
    return pl.pallas_call(
        kern,
        out_shape=jax.ShapeDtypeStruct((N, HW, C_PAD), jnp.float32),
        grid=(N,),
        in_specs=[
            pl.BlockSpec((1, Hp, Wp, C), lambda n: (n, 0, 0, 0)),
            pl.BlockSpec((1, HW, C_STEM), lambda n: (n, 0, 0)),
            pl.BlockSpec((9, C_EXP), full),
            pl.BlockSpec((1, C_EXP), full),
            pl.BlockSpec((1, C_EXP), full),
            pl.BlockSpec((C_EXP, C_PAD), full),
            pl.BlockSpec((1, C_PAD), full),
            pl.BlockSpec((C_PAD, C_EXP), full),
            pl.BlockSpec((1, C_EXP), full),
            pl.BlockSpec((C_EXP, C_STEM), full),
            pl.BlockSpec((1, C_STEM), full),
            pl.BlockSpec((1, C_STEM), full),
            pl.BlockSpec((C_STEM, C_PAD), full),
            pl.BlockSpec((1, C_PAD), full),
            pl.BlockSpec((1, C_PAD), full),
        ],
        out_specs=pl.BlockSpec((1, HW, C_PAD), lambda n: (n, 0, 0)),
        compiler_params=_MOSAIC_PARAMS,
    )(xe_pad, x0,
      p["dw_w"], p["dw_scale"], p["dw_bias"],
      p["se_w1"], p["se_b1"], p["se_w2"], p["se_b2"],
      p["proj_w"], p["proj_scale"], p["proj_bias"],
      p["head_w"], p["head_scale"], p["head_bias"])


# ----------------------------------------------------------------------------
# Plain-JAX glue: stem patch extraction (layout plumbing, not the hot path)
# TODO(synk): at real 224x224 resolution do the stride-2 patch gather in-kernel
# over halo blocks instead of wrapper-side im2col (avoids the 9x duplication).
# ----------------------------------------------------------------------------
def im2col(x_nhwc, ksize, stride, pad):
    N, H, W, C = x_nhwc.shape
    xp = jnp.pad(x_nhwc, ((0, 0), (pad, pad), (pad, pad), (0, 0)))
    Ho = (H + 2 * pad - ksize) // stride + 1
    Wo = (W + 2 * pad - ksize) // stride + 1
    cols = []
    for di in range(ksize):
        for dj in range(ksize):
            cols.append(xp[:, di:di + stride * Ho:stride, dj:dj + stride * Wo:stride, :])
    a = jnp.concatenate(cols, axis=-1)                      # (N, Ho, Wo, k*k*C)
    return a.reshape(N * Ho * Wo, ksize * ksize * C), Ho, Wo


# ----------------------------------------------------------------------------
# Parameter construction (deterministic, synthetic; matmul weights in bf16)
# ----------------------------------------------------------------------------
def init_params(key):
    ks = jax.random.split(key, 8)

    def w(k, shape, s=0.1):
        return (s * jax.random.normal(k, shape)).astype(jnp.float32)

    def bn(c):
        # folded BatchNorm: scale = gamma/sqrt(var+eps), bias = beta - mean*scale
        return jnp.ones((1, c), jnp.float32), jnp.zeros((1, c), jnp.float32)

    def pad_cols(a, n):
        return jnp.pad(a, ((0, 0), (0, n - a.shape[1])))

    def pad_rows(a, n):
        return jnp.pad(a, ((0, n - a.shape[0]), (0, 0)))

    p = {}
    p["stem_w"] = w(ks[0], (9 * C_IN, C_STEM)).astype(jnp.bfloat16)
    p["stem_scale"], p["stem_bias"] = bn(C_STEM)
    p["exp_w"] = w(ks[1], (C_STEM, C_EXP)).astype(jnp.bfloat16)
    p["exp_scale"], p["exp_bias"] = bn(C_EXP)
    p["dw_w"] = w(ks[2], (9, C_EXP))                        # VPU math stays f32
    p["dw_scale"], p["dw_bias"] = bn(C_EXP)
    # SE: hidden dim zero-padded 8 -> 128 lanes (exactly equivalent numerics).
    p["se_w1"] = pad_cols(w(ks[3], (C_EXP, C_SE)), C_PAD).astype(jnp.bfloat16)
    p["se_b1"] = jnp.zeros((1, C_PAD), jnp.float32)
    p["se_w2"] = pad_rows(w(ks[4], (C_SE, C_EXP)), C_PAD).astype(jnp.bfloat16)
    p["se_b2"] = jnp.zeros((1, C_EXP), jnp.float32)
    p["proj_w"] = w(ks[5], (C_EXP, C_STEM)).astype(jnp.bfloat16)
    p["proj_scale"], p["proj_bias"] = bn(C_STEM)
    # head: output channels zero-padded 64 -> 128 lanes (sliced in the wrapper).
    p["head_w"] = pad_cols(w(ks[6], (C_STEM, C_OUT)), C_PAD).astype(jnp.bfloat16)
    hs, hb = bn(C_OUT)
    p["head_scale"] = pad_cols(hs, C_PAD)
    p["head_bias"] = pad_cols(hb, C_PAD)
    return p


# ----------------------------------------------------------------------------
# Forward: EfficientNet.features (reduced depth), NCHW in -> NCHW out
# ----------------------------------------------------------------------------
@jax.jit
def efficientnet_features(x_nchw, p):
    x = jnp.transpose(x_nchw, (0, 2, 3, 1)).astype(jnp.float32)   # NCHW -> NHWC
    N = x.shape[0]

    # stem patches (bf16 storage for the kernel input)
    a, Ho, Wo = im2col(x, ksize=3, stride=2, pad=1)
    a = a.astype(jnp.bfloat16)

    # Kernel A: fused stem conv + BN + SiLU + expand 1x1 + BN + SiLU
    x0, xe = stem_expand(a, p["stem_w"], p["stem_scale"], p["stem_bias"],
                         p["exp_w"], p["exp_scale"], p["exp_bias"])

    # Spatial zero-pad of the expanded activation for the 3x3 depthwise conv;
    # W is padded up to a multiple of 8 so in-kernel slices stay sublane-aligned.
    xe_sp = xe.reshape(N, Ho, Wo, C_EXP)
    Wp = ((Wo + 2 + 7) // 8) * 8
    xe_pad = jnp.pad(xe_sp, ((0, 0), (1, 1), (1, Wp - Wo - 1), (0, 0)))
    x0_sp = x0.reshape(N, Ho * Wo, C_STEM)

    # Kernel B: fused depthwise + SE + project + residual + head
    out = mbconv_head(xe_pad, x0_sp, p, Ho, Wo)             # (N, Ho*Wo, 128) f32
    out = out[:, :, :C_OUT].reshape(N, Ho, Wo, C_OUT)
    return jnp.transpose(out, (0, 3, 1, 2))                 # NHWC -> NCHW


if __name__ == "__main__":
    key = jax.random.PRNGKey(0)
    pkey, xkey = jax.random.split(key)
    params = init_params(pkey)
    x = jax.random.normal(xkey, (2, 3, 16, 16), jnp.float32)   # NCHW, small spatial
    out = efficientnet_features(x, params)
    jax.block_until_ready(out)
    assert out.shape == (2, C_OUT, 8, 8), out.shape
    print("KERNEL_OK")
</pallas_src>

<mosaic_0001>
module attributes {stable_mosaic.version = 11 : i64} {
  func.func @_stem_expand_kernel(%arg0: i32, %arg1: memref<128x27xbf16, #tpu.memory_space<vmem>>, %arg2: memref<27x32xbf16, #tpu.memory_space<vmem>>, %arg3: memref<1x32xf32, #tpu.memory_space<vmem>>, %arg4: memref<1x32xf32, #tpu.memory_space<vmem>>, %arg5: memref<32x128xbf16, #tpu.memory_space<vmem>>, %arg6: memref<1x128xf32, #tpu.memory_space<vmem>>, %arg7: memref<1x128xf32, #tpu.memory_space<vmem>>, %arg8: memref<128x32xf32, #tpu.memory_space<vmem>>, %arg9: memref<128x128xbf16, #tpu.memory_space<vmem>>) attributes {dimension_semantics = [#tpu.dimension_semantics<parallel>], iteration_bounds = array<i64: 1>, scalar_prefetch = 0 : i64, scratch_operands = 0 : i64, tpu.core_type = #tpu.core_type<tc>, window_params = [{transform_indices = @transform_0, window_bounds = array<i64: 128, 27>}, {pipeline_mode = #tpu.pipeline_mode<synchronous>, transform_indices = @transform_1, window_bounds = array<i64: 27, 32>}, {pipeline_mode = #tpu.pipeline_mode<synchronous>, transform_indices = @transform_2, window_bounds = array<i64: 1, 32>}, {pipeline_mode = #tpu.pipeline_mode<synchronous>, transform_indices = @transform_3, window_bounds = array<i64: 1, 32>}, {pipeline_mode = #tpu.pipeline_mode<synchronous>, transform_indices = @transform_4, window_bounds = array<i64: 32, 128>}, {pipeline_mode = #tpu.pipeline_mode<synchronous>, transform_indices = @transform_5, window_bounds = array<i64: 1, 128>}, {pipeline_mode = #tpu.pipeline_mode<synchronous>, transform_indices = @transform_6, window_bounds = array<i64: 1, 128>}, {transform_indices = @transform_7, window_bounds = array<i64: 128, 32>}, {transform_indices = @transform_8, window_bounds = array<i64: 128, 128>}]} {
    %c0 = arith.constant 0 : index
    %c0_0 = arith.constant 0 : index
    %0 = vector.load %arg1[%c0, %c0_0] : memref<128x27xbf16, #tpu.memory_space<vmem>>, vector<128x27xbf16>
    %c0_1 = arith.constant 0 : index
    %c0_2 = arith.constant 0 : index
    %1 = vector.load %arg2[%c0_1, %c0_2] : memref<27x32xbf16, #tpu.memory_space<vmem>>, vector<27x32xbf16>
    %cst = arith.constant dense<0.000000e+00> : vector<128x32xf32>
    %2 = tpu.matmul %0, %1, %cst {dimension_numbers = #tpu.dot_dimension_numbers<[1], [0], [0], [1], [0, 0, 1, 1], [], []>} : vector<128x27xbf16>, vector<27x32xbf16>, vector<128x32xf32> -> vector<128x32xf32>
    %c0_3 = arith.constant 0 : index
    %c0_4 = arith.constant 0 : index
    %3 = vector.load %arg3[%c0_3, %c0_4] : memref<1x32xf32, #tpu.memory_space<vmem>>, vector<1x32xf32>
    %4 = vector.broadcast %3 : vector<1x32xf32> to vector<128x32xf32>
    %5 = arith.mulf %2, %4 : vector<128x32xf32>
    %c0_5 = arith.constant 0 : index
    %c0_6 = arith.constant 0 : index
    %6 = vector.load %arg4[%c0_5, %c0_6] : memref<1x32xf32, #tpu.memory_space<vmem>>, vector<1x32xf32>
    %7 = vector.broadcast %6 : vector<1x32xf32> to vector<128x32xf32>
    %8 = arith.addf %5, %7 : vector<128x32xf32>
    %9 = arith.negf %8 : vector<128x32xf32>
    %10 = math.exp %9 : vector<128x32xf32>
    %cst_7 = arith.constant 1.000000e+00 : f32
    %11 = vector.broadcast %cst_7 : f32 to vector<128x32xf32>
    %12 = arith.addf %11, %10 : vector<128x32xf32>
    %13 = arith.divf %11, %12 : vector<128x32xf32>
    %14 = arith.mulf %8, %13 : vector<128x32xf32>
    %c0_8 = arith.constant 0 : index
    %c0_9 = arith.constant 0 : index
    %15 = vector.load %arg8[%c0_8, %c0_9] : memref<128x32xf32, #tpu.memory_space<vmem>>, vector<128x32xf32>
    tpu.vector_store %arg8[%c0_8, %c0_9], %14 {strides = array<i32>} : memref<128x32xf32, #tpu.memory_space<vmem>>, vector<128x32xf32>,
    %16 = arith.truncf %14 : vector<128x32xf32> to vector<128x32xbf16>
    %c0_10 = arith.constant 0 : index
    %c0_11 = arith.constant 0 : index
    %17 = vector.load %arg5[%c0_10, %c0_11] : memref<32x128xbf16, #tpu.memory_space<vmem>>, vector<32x128xbf16>
    %cst_12 = arith.constant dense<0.000000e+00> : vector<128x128xf32>
    %18 = tpu.matmul %16, %17, %cst_12 {dimension_numbers = #tpu.dot_dimension_numbers<[1], [0], [0], [1], [0, 0, 1, 1], [], []>} : vector<128x32xbf16>, vector<32x128xbf16>, vector<128x128xf32> -> vector<128x128xf32>
    %c0_13 = arith.constant 0 : index
    %c0_14 = arith.constant 0 : index
    %19 = vector.load %arg6[%c0_13, %c0_14] : memref<1x128xf32, #tpu.memory_space<vmem>>, vector<1x128xf32>
    %20 = vector.broadcast %19 : vector<1x128xf32> to vector<128x128xf32>
    %21 = arith.mulf %18, %20 : vector<128x128xf32>
    %c0_15 = arith.constant 0 : index
    %c0_16 = arith.constant 0 : index
    %22 = vector.load %arg7[%c0_15, %c0_16] : memref<1x128xf32, #tpu.memory_space<vmem>>, vector<1x128xf32>
    %23 = vector.broadcast %22 : vector<1x128xf32> to vector<128x128xf32>
    %24 = arith.addf %21, %23 : vector<128x128xf32>
    %25 = arith.negf %24 : vector<128x128xf32>
    %26 = math.exp %25 : vector<128x128xf32>
    %cst_17 = arith.constant 1.000000e+00 : f32
    %27 = vector.broadcast %cst_17 : f32 to vector<128x128xf32>
    %28 = arith.addf %27, %26 : vector<128x128xf32>
    %29 = arith.divf %27, %28 : vector<128x128xf32>
    %30 = arith.mulf %24, %29 : vector<128x128xf32>
    %31 = arith.truncf %30 : vector<128x128xf32> to vector<128x128xbf16>
    %c0_18 = arith.constant 0 : index
    %c0_19 = arith.constant 0 : index
    %32 = vector.load %arg9[%c0_18, %c0_19] : memref<128x128xbf16, #tpu.memory_space<vmem>>, vector<128x128xbf16>
    tpu.vector_store %arg9[%c0_18, %c0_19], %31 {strides = array<i32>} : memref<128x128xbf16, #tpu.memory_space<vmem>>, vector<128x128xbf16>,
    return
  }
  func.func @transform_0(%arg0: i32) -> (i32, i32) {
    %c0_i32 = arith.constant 0 : i32
    %c0_i32_0 = arith.constant 0 : i32
    return %arg0, %c0_i32 : i32, i32
  }
  func.func @transform_1(%arg0: i32) -> (i32, i32) {
    %c0_i32 = arith.constant 0 : i32
    %c0_i32_0 = arith.constant 0 : i32
    %c0_i32_1 = arith.constant 0 : i32
    return %c0_i32, %c0_i32_0 : i32, i32
  }
  func.func @transform_2(%arg0: i32) -> (i32, i32) {
    %c0_i32 = arith.constant 0 : i32
    %c0_i32_0 = arith.constant 0 : i32
    %c0_i32_1 = arith.constant 0 : i32
    return %c0_i32, %c0_i32_0 : i32, i32
  }
  func.func @transform_3(%arg0: i32) -> (i32, i32) {
    %c0_i32 = arith.constant 0 : i32
    %c0_i32_0 = arith.constant 0 : i32
    %c0_i32_1 = arith.constant 0 : i32
    return %c0_i32, %c0_i32_0 : i32, i32
  }
  func.func @transform_4(%arg0: i32) -> (i32, i32) {
    %c0_i32 = arith.constant 0 : i32
    %c0_i32_0 = arith.constant 0 : i32
    %c0_i32_1 = arith.constant 0 : i32
    return %c0_i32, %c0_i32_0 : i32, i32
  }
  func.func @transform_5(%arg0: i32) -> (i32, i32) {
    %c0_i32 = arith.constant 0 : i32
    %c0_i32_0 = arith.constant 0 : i32
    %c0_i32_1 = arith.constant 0 : i32
    return %c0_i32, %c0_i32_0 : i32, i32
  }
  func.func @transform_6(%arg0: i32) -> (i32, i32) {
    %c0_i32 = arith.constant 0 : i32
    %c0_i32_0 = arith.constant 0 : i32
    %c0_i32_1 = arith.constant 0 : i32
    return %c0_i32, %c0_i32_0 : i32, i32
  }
  func.func @transform_7(%arg0: i32) -> (i32, i32) {
    %c0_i32 = arith.constant 0 : i32
    %c0_i32_0 = arith.constant 0 : i32
    return %arg0, %c0_i32 : i32, i32
  }
  func.func @transform_8(%arg0: i32) -> (i32, i32) {
    %c0_i32 = arith.constant 0 : i32
    %c0_i32_0 = arith.constant 0 : i32
    return %arg0, %c0_i32 : i32, i32
  }
}

module attributes {stable_mosaic.version = 11 : i64} {
  func.func @_mbconv_head_kernel(%arg0: i32, %arg1: memref<1x10x16x128xbf16, #tpu.memory_space<vmem>>, %arg2: memref<1x64x32xf32, #tpu.memory_space<vmem>>, %arg3: memref<9x128xf32, #tpu.memory_space<vmem>>, %arg4: memref<1x128xf32, #tpu.memory_space<vmem>>, %arg5: memref<1x128xf32, #tpu.memory_space<vmem>>, %arg6: memref<128x128xbf16, #tpu.memory_space<vmem>>, %arg7: memref<1x128xf32, #tpu.memory_space<vmem>>, %arg8: memref<128x128xbf16, #tpu.memory_space<vmem>>, %arg9: memref<1x128xf32, #tpu.memory_space<vmem>>, %arg10: memref<128x32xbf16, #tpu.memory_space<vmem>>, %arg11: memref<1x32xf32, #tpu.memory_space<vmem>>, %arg12: memref<1x32xf32, #tpu.memory_space<vmem>>, %arg13: memref<32x128xbf16, #tpu.memory_space<vmem>>, %arg14: memref<1x128xf32, #tpu.memory_space<vmem>>, %arg15: memref<1x128xf32, #tpu.memory_space<vmem>>, %arg16: memref<1x64x128xf32, #tpu.memory_space<vmem>>) attributes {dimension_semantics = [#tpu.dimension_semantics<parallel>], iteration_bounds = array<i64: 2>, scalar_prefetch = 0 : i64, scratch_operands = 0 : i64, tpu.core_type = #tpu.core_type<tc>, window_params = [{transform_indices = @transform_0, window_bounds = array<i64: 1, 10, 16, 128>}, {transform_indices = @transform_1, window_bounds = array<i64: 1, 64, 32>}, {pipeline_mode = #tpu.pipeline_mode<synchronous>, transform_indices = @transform_2, window_bounds = array<i64: 9, 128>}, {pipeline_mode = #tpu.pipeline_mode<synchronous>, transform_indices = @transform_3, window_bounds = array<i64: 1, 128>}, {pipeline_mode = #tpu.pipeline_mode<synchronous>, transform_indices = @transform_4, window_bounds = array<i64: 1, 128>}, {pipeline_mode = #tpu.pipeline_mode<synchronous>, transform_indices = @transform_5, window_bounds = array<i64: 128, 128>}, {pipeline_mode = #tpu.pipeline_mode<synchronous>, transform_indices = @transform_6, window_bounds = array<i64: 1, 128>}, {pipeline_mode = #tpu.pipeline_mode<synchronous>, transform_indices = @transform_7, window_bounds = array<i64: 128, 128>}, {pipeline_mode = #tpu.pipeline_mode<synchronous>, transform_indices = @transform_8, window_bounds = array<i64: 1, 128>}, {pipeline_mode = #tpu.pipeline_mode<synchronous>, transform_indices = @transform_9, window_bounds = array<i64: 128, 32>}, {pipeline_mode = #tpu.pipeline_mode<synchronous>, transform_indices = @transform_10, window_bounds = array<i64: 1, 32>}, {pipeline_mode = #tpu.pipeline_mode<synchronous>, transform_indices = @transform_11, window_bounds = array<i64: 1, 32>}, {pipeline_mode = #tpu.pipeline_mode<synchronous>, transform_indices = @transform_12, window_bounds = array<i64: 32, 128>}, {pipeline_mode = #tpu.pipeline_mode<synchronous>, transform_indices = @transform_13, window_bounds = array<i64: 1, 128>}, {pipeline_mode = #tpu.pipeline_mode<synchronous>, transform_indices = @transform_14, window_bounds = array<i64: 1, 128>}, {transform_indices = @transform_15, window_bounds = array<i64: 1, 64, 128>}]} {
    %c0 = arith.constant 0 : index
    %c0_0 = arith.constant 0 : index
    %c0_1 = arith.constant 0 : index
    %c0_2 = arith.constant 0 : index
    %0 = vector.load %arg1[%c0, %c0_0, %c0_1, %c0_2] : memref<1x10x16x128xbf16, #tpu.memory_space<vmem>>, vector<1x10x16x128xbf16>
    %1 = vector.shape_cast %0 : vector<1x10x16x128xbf16> to vector<10x16x128xbf16>
    %2 = arith.extf %1 : vector<10x16x128xbf16> to vector<10x16x128xf32>
    %c0_3 = arith.constant 0 : index
    %c0_4 = arith.constant 0 : index
    %3 = vector.load %arg3[%c0_3, %c0_4] : memref<9x128xf32, #tpu.memory_space<vmem>>, vector<9x128xf32>
    %cst = arith.constant 0.000000e+00 : f32
    %4 = vector.broadcast %cst : f32 to vector<8x8x128xf32>
    %5 = vector.extract_strided_slice %2 {offsets = [0, 0, 0], sizes = [8, 8, 128], strides = [1, 1, 1]} : vector<10x16x128xf32> to vector<8x8x128xf32>
    %6 = vector.extract_strided_slice %3 {offsets = [0, 0], sizes = [1, 128], strides = [1, 1]} : vector<9x128xf32> to vector<1x128xf32>
    %7 = vector.shape_cast %6 : vector<1x128xf32> to vector<128xf32>
    %8 = vector.shape_cast %7 : vector<128xf32> to vector<1x1x128xf32>
    %9 = vector.broadcast %8 : vector<1x1x128xf32> to vector<8x8x128xf32>
    %10 = arith.mulf %5, %9 : vector<8x8x128xf32>
    %11 = arith.addf %4, %10 : vector<8x8x128xf32>
    %12 = vector.extract_strided_slice %2 {offsets = [1, 0, 0], sizes = [8, 8, 128], strides = [1, 1, 1]} : vector<10x16x128xf32> to vector<8x8x128xf32>
    %13 = vector.extract_strided_slice %3 {offsets = [3, 0], sizes = [1, 128], strides = [1, 1]} : vector<9x128xf32> to vector<1x128xf32>
    %14 = vector.shape_cast %13 : vector<1x128xf32> to vector<128xf32>
    %15 = vector.shape_cast %14 : vector<128xf32> to vector<1x1x128xf32>
    %16 = vector.broadcast %15 : vector<1x1x128xf32> to vector<8x8x128xf32>
    %17 = arith.mulf %12, %16 : vector<8x8x128xf32>
    %18 = arith.addf %11, %17 : vector<8x8x128xf32>
    %19 = vector.extract_strided_slice %2 {offsets = [2, 0, 0], sizes = [8, 8, 128], strides = [1, 1, 1]} : vector<10x16x128xf32> to vector<8x8x128xf32>
    %20 = vector.extract_strided_slice %3 {offsets = [6, 0], sizes = [1, 128], strides = [1, 1]} : vector<9x128xf32> to vector<1x128xf32>
    %21 = vector.shape_cast %20 : vector<1x128xf32> to vector<128xf32>
    %22 = vector.shape_cast %21 : vector<128xf32> to vector<1x1x128xf32>
    %23 = vector.broadcast %22 : vector<1x1x128xf32> to vector<8x8x128xf32>
    %24 = arith.mulf %19, %23 : vector<8x8x128xf32>
    %25 = arith.addf %18, %24 : vector<8x8x128xf32>
    %c15_i32 = arith.constant 15 : i32
    %26 = tpu.dynamic_rotate %2 by %c15_i32 dim 1 : vector<10x16x128xf32>, i32 -> vector<10x16x128xf32>
    %27 = vector.extract_strided_slice %26 {offsets = [0, 0, 0], sizes = [8, 8, 128], strides = [1, 1, 1]} : vector<10x16x128xf32> to vector<8x8x128xf32>
    %28 = vector.extract_strided_slice %3 {offsets = [1, 0], sizes = [1, 128], strides = [1, 1]} : vector<9x128xf32> to vector<1x128xf32>
    %29 = vector.shape_cast %28 : vector<1x128xf32> to vector<128xf32>
    %30 = vector.shape_cast %29 : vector<128xf32> to vector<1x1x128xf32>
    %31 = vector.broadcast %30 : vector<1x1x128xf32> to vector<8x8x128xf32>
    %32 = arith.mulf %27, %31 : vector<8x8x128xf32>
    %33 = arith.addf %25, %32 : vector<8x8x128xf32>
    %34 = vector.extract_strided_slice %26 {offsets = [1, 0, 0], sizes = [8, 8, 128], strides = [1, 1, 1]} : vector<10x16x128xf32> to vector<8x8x128xf32>
    %35 = vector.extract_strided_slice %3 {offsets = [4, 0], sizes = [1, 128], strides = [1, 1]} : vector<9x128xf32> to vector<1x128xf32>
    %36 = vector.shape_cast %35 : vector<1x128xf32> to vector<128xf32>
    %37 = vector.shape_cast %36 : vector<128xf32> to vector<1x1x128xf32>
    %38 = vector.broadcast %37 : vector<1x1x128xf32> to vector<8x8x128xf32>
    %39 = arith.mulf %34, %38 : vector<8x8x128xf32>
    %40 = arith.addf %33, %39 : vector<8x8x128xf32>
    %41 = vector.extract_strided_slice %26 {offsets = [2, 0, 0], sizes = [8, 8, 128], strides = [1, 1, 1]} : vector<10x16x128xf32> to vector<8x8x128xf32>
    %42 = vector.extract_strided_slice %3 {offsets = [7, 0], sizes = [1, 128], strides = [1, 1]} : vector<9x128xf32> to vector<1x128xf32>
    %43 = vector.shape_cast %42 : vector<1x128xf32> to vector<128xf32>
    %44 = vector.shape_cast %43 : vector<128xf32> to vector<1x1x128xf32>
    %45 = vector.broadcast %44 : vector<1x1x128xf32> to vector<8x8x128xf32>
    %46 = arith.mulf %41, %45 : vector<8x8x128xf32>
    %47 = arith.addf %40, %46 : vector<8x8x128xf32>
    %c14_i32 = arith.constant 14 : i32
    %48 = tpu.dynamic_rotate %2 by %c14_i32 dim 1 : vector<10x16x128xf32>, i32 -> vector<10x16x128xf32>
    %49 = vector.extract_strided_slice %48 {offsets = [0, 0, 0], sizes = [8, 8, 128], strides = [1, 1, 1]} : vector<10x16x128xf32> to vector<8x8x128xf32>
    %50 = vector.extract_strided_slice %3 {offsets = [2, 0], sizes = [1, 128], strides = [1, 1]} : vector<9x128xf32> to vector<1x128xf32>
    %51 = vector.shape_cast %50 : vector<1x128xf32> to vector<128xf32>
    %52 = vector.shape_cast %51 : vector<128xf32> to vector<1x1x128xf32>
    %53 = vector.broadcast %52 : vector<1x1x128xf32> to vector<8x8x128xf32>
    %54 = arith.mulf %49, %53 : vector<8x8x128xf32>
    %55 = arith.addf %47, %54 : vector<8x8x128xf32>
    %56 = vector.extract_strided_slice %48 {offsets = [1, 0, 0], sizes = [8, 8, 128], strides = [1, 1, 1]} : vector<10x16x128xf32> to vector<8x8x128xf32>
    %57 = vector.extract_strided_slice %3 {offsets = [5, 0], sizes = [1, 128], strides = [1, 1]} : vector<9x128xf32> to vector<1x128xf32>
    %58 = vector.shape_cast %57 : vector<1x128xf32> to vector<128xf32>
    %59 = vector.shape_cast %58 : vector<128xf32> to vector<1x1x128xf32>
    %60 = vector.broadcast %59 : vector<1x1x128xf32> to vector<8x8x128xf32>
    %61 = arith.mulf %56, %60 : vector<8x8x128xf32>
    %62 = arith.addf %55, %61 : vector<8x8x128xf32>
    %63 = vector.extract_strided_slice %48 {offsets = [2, 0, 0], sizes = [8, 8, 128], strides = [1, 1, 1]} : vector<10x16x128xf32> to vector<8x8x128xf32>
    %64 = vector.extract_strided_slice %3 {offsets = [8, 0], sizes = [1, 128], strides = [1, 1]} : vector<9x128xf32> to vector<1x128xf32>
    %65 = vector.shape_cast %64 : vector<1x128xf32> to vector<128xf32>
    %66 = vector.shape_cast %65 : vector<128xf32> to vector<1x1x128xf32>
    %67 = vector.broadcast %66 : vector<1x1x128xf32> to vector<8x8x128xf32>
    %68 = arith.mulf %63, %67 : vector<8x8x128xf32>
    %69 = arith.addf %62, %68 : vector<8x8x128xf32>
    %c0_5 = arith.constant 0 : index
    %c0_6 = arith.constant 0 : index
    %70 = vector.load %arg4[%c0_5, %c0_6] : memref<1x128xf32, #tpu.memory_space<vmem>>, vector<1x128xf32>
    %71 = vector.shape_cast %70 : vector<1x128xf32> to vector<128xf32>
    %72 = vector.shape_cast %71 : vector<128xf32> to vector<1x1x128xf32>
    %73 = vector.broadcast %72 : vector<1x1x128xf32> to vector<8x8x128xf32>
    %74 = arith.mulf %69, %73 : vector<8x8x128xf32>
    %c0_7 = arith.constant 0 : index
    %c0_8 = arith.constant 0 : index
    %75 = vector.load %arg5[%c0_7, %c0_8] : memref<1x128xf32, #tpu.memory_space<vmem>>, vector<1x128xf32>
    %76 = vector.shape_cast %75 : vector<1x128xf32> to vector<128xf32>
    %77 = vector.shape_cast %76 : vector<128xf32> to vector<1x1x128xf32>
    %78 = vector.broadcast %77 : vector<1x1x128xf32> to vector<8x8x128xf32>
    %79 = arith.addf %74, %78 : vector<8x8x128xf32>
    %80 = arith.negf %79 : vector<8x8x128xf32>
    %81 = math.exp %80 : vector<8x8x128xf32>
    %cst_9 = arith.constant 1.000000e+00 : f32
    %82 = vector.broadcast %cst_9 : f32 to vector<8x8x128xf32>
    %83 = arith.addf %82, %81 : vector<8x8x128xf32>
    %84 = arith.divf %82, %83 : vector<8x8x128xf32>
    %85 = arith.mulf %79, %84 : vector<8x8x128xf32>
    %86 = vector.shape_cast %85 : vector<8x8x128xf32> to vector<64x128xf32>
    %cst_10 = arith.constant dense<0.000000e+00> : vector<128xf32>
    %87 = vector.multi_reduction <add>, %86, %cst_10 [0] : vector<64x128xf32> to vector<128xf32>
    %88 = vector.shape_cast %87 : vector<128xf32> to vector<1x128xf32>
    %cst_11 = arith.constant 6.400000e+01 : f32
    %89 = vector.broadcast %cst_11 : f32 to vector<1x128xf32>
    %90 = arith.divf %88, %89 : vector<1x128xf32>
    %91 = arith.truncf %90 : vector<1x128xf32> to vector<1x128xbf16>
    %c0_12 = arith.constant 0 : index
    %c0_13 = arith.constant 0 : index
    %92 = vector.load %arg6[%c0_12, %c0_13] : memref<128x128xbf16, #tpu.memory_space<vmem>>, vector<128x128xbf16>
    %cst_14 = arith.constant dense<0.000000e+00> : vector<1x128xf32>
    %93 = tpu.matmul %91, %92, %cst_14 {dimension_numbers = #tpu.dot_dimension_numbers<[1], [0], [0], [1], [0, 0, 1, 1], [], []>} : vector<1x128xbf16>, vector<128x128xbf16>, vector<1x128xf32> -> vector<1x128xf32>
    %c0_15 = arith.constant 0 : index
    %c0_16 = arith.constant 0 : index
    %94 = vector.load %arg7[%c0_15, %c0_16] : memref<1x128xf32, #tpu.memory_space<vmem>>, vector<1x128xf32>
    %95 = arith.addf %93, %94 : vector<1x128xf32>
    %96 = arith.negf %95 : vector<1x128xf32>
    %97 = math.exp %96 : vector<1x128xf32>
    %cst_17 = arith.constant 1.000000e+00 : f32
    %98 = vector.broadcast %cst_17 : f32 to vector<1x128xf32>
    %99 = arith.addf %98, %97 : vector<1x128xf32>
    %100 = arith.divf %98, %99 : vector<1x128xf32>
    %101 = arith.mulf %95, %100 : vector<1x128xf32>
    %102 = arith.truncf %101 : vector<1x128xf32> to vector<1x128xbf16>
    %c0_18 = arith.constant 0 : index
    %c0_19 = arith.constant 0 : index
    %103 = vector.load %arg8[%c0_18, %c0_19] : memref<128x128xbf16, #tpu.memory_space<vmem>>, vector<128x128xbf16>
    %cst_20 = arith.constant dense<0.000000e+00> : vector<1x128xf32>
    %104 = tpu.matmul %102, %103, %cst_20 {dimension_numbers = #tpu.dot_dimension_numbers<[1], [0], [0], [1], [0, 0, 1, 1], [], []>} : vector<1x128xbf16>, vector<128x128xbf16>, vector<1x128xf32> -> vector<1x128xf32>
    %c0_21 = arith.constant 0 : index
    %c0_22 = arith.constant 0 : index
    %105 = vector.load %arg9[%c0_21, %c0_22] : memref<1x128xf32, #tpu.memory_space<vmem>>, vector<1x128xf32>
    %106 = arith.addf %104, %105 : vector<1x128xf32>
    %107 = arith.negf %106 : vector<1x128xf32>
    %108 = math.exp %107 : vector<1x128xf32>
    %cst_23 = arith.constant 1.000000e+00 : f32
    %109 = vector.broadcast %cst_23 : f32 to vector<1x128xf32>
    %110 = arith.addf %109, %108 : vector<1x128xf32>
    %111 = arith.divf %109, %110 : vector<1x128xf32>
    %112 = vector.broadcast %111 : vector<1x128xf32> to vector<64x128xf32>
    %113 = arith.mulf %86, %112 : vector<64x128xf32>
    %114 = arith.truncf %113 : vector<64x128xf32> to vector<64x128xbf16>
    %c0_24 = arith.constant 0 : index
    %c0_25 = arith.constant 0 : index
    %115 = vector.load %arg10[%c0_24, %c0_25] : memref<128x32xbf16, #tpu.memory_space<vmem>>, vector<128x32xbf16>
    %cst_26 = arith.constant dense<0.000000e+00> : vector<64x32xf32>
    %116 = tpu.matmul %114, %115, %cst_26 {dimension_numbers = #tpu.dot_dimension_numbers<[1], [0], [0], [1], [0, 0, 1, 1], [], []>} : vector<64x128xbf16>, vector<128x32xbf16>, vector<64x32xf32> -> vector<64x32xf32>
    %c0_27 = arith.constant 0 : index
    %c0_28 = arith.constant 0 : index
    %117 = vector.load %arg11[%c0_27, %c0_28] : memref<1x32xf32, #tpu.memory_space<vmem>>, vector<1x32xf32>
    %118 = vector.broadcast %117 : vector<1x32xf32> to vector<64x32xf32>
    %119 = arith.mulf %116, %118 : vector<64x32xf32>
    %c0_29 = arith.constant 0 : index
    %c0_30 = arith.constant 0 : index
    %120 = vector.load %arg12[%c0_29, %c0_30] : memref<1x32xf32, #tpu.memory_space<vmem>>, vector<1x32xf32>
    %121 = vector.broadcast %120 : vector<1x32xf32> to vector<64x32xf32>
    %122 = arith.addf %119, %121 : vector<64x32xf32>
    %c0_31 = arith.constant 0 : index
    %c0_32 = arith.constant 0 : index
    %c0_33 = arith.constant 0 : index
    %123 = vector.load %arg2[%c0_31, %c0_32, %c0_33] : memref<1x64x32xf32, #tpu.memory_space<vmem>>, vector<1x64x32xf32>
    %124 = vector.shape_cast %123 : vector<1x64x32xf32> to vector<64x32xf32>
    %125 = arith.addf %122, %124 : vector<64x32xf32>
    %126 = arith.truncf %125 : vector<64x32xf32> to vector<64x32xbf16>
    %c0_34 = arith.constant 0 : index
    %c0_35 = arith.constant 0 : index
    %127 = vector.load %arg13[%c0_34, %c0_35] : memref<32x128xbf16, #tpu.memory_space<vmem>>, vector<32x128xbf16>
    %cst_36 = arith.constant dense<0.000000e+00> : vector<64x128xf32>
    %128 = tpu.matmul %126, %127, %cst_36 {dimension_numbers = #tpu.dot_dimension_numbers<[1], [0], [0], [1], [0, 0, 1, 1], [], []>} : vector<64x32xbf16>, vector<32x128xbf16>, vector<64x128xf32> -> vector<64x128xf32>
    %c0_37 = arith.constant 0 : index
    %c0_38 = arith.constant 0 : index
    %129 = vector.load %arg14[%c0_37, %c0_38] : memref<1x128xf32, #tpu.memory_space<vmem>>, vector<1x128xf32>
    %130 = vector.broadcast %129 : vector<1x128xf32> to vector<64x128xf32>
    %131 = arith.mulf %128, %130 : vector<64x128xf32>
    %c0_39 = arith.constant 0 : index
    %c0_40 = arith.constant 0 : index
    %132 = vector.load %arg15[%c0_39, %c0_40] : memref<1x128xf32, #tpu.memory_space<vmem>>, vector<1x128xf32>
    %133 = vector.broadcast %132 : vector<1x128xf32> to vector<64x128xf32>
    %134 = arith.addf %131, %133 : vector<64x128xf32>
    %135 = arith.negf %134 : vector<64x128xf32>
    %136 = math.exp %135 : vector<64x128xf32>
    %cst_41 = arith.constant 1.000000e+00 : f32
    %137 = vector.broadcast %cst_41 : f32 to vector<64x128xf32>
    %138 = arith.addf %137, %136 : vector<64x128xf32>
    %139 = arith.divf %137, %138 : vector<64x128xf32>
    %140 = arith.mulf %134, %139 : vector<64x128xf32>
    %c0_42 = arith.constant 0 : index
    %c0_43 = arith.constant 0 : index
    %c0_44 = arith.constant 0 : index
    %141 = vector.load %arg16[%c0_42, %c0_43, %c0_44] : memref<1x64x128xf32, #tpu.memory_space<vmem>>, vector<1x64x128xf32>
    %142 = vector.shape_cast %141 : vector<1x64x128xf32> to vector<64x128xf32>
    %143 = vector.shape_cast %140 : vector<64x128xf32> to vector<1x64x128xf32>
    tpu.vector_store %arg16[%c0_42, %c0_43, %c0_44], %143 {strides = array<i32>} : memref<1x64x128xf32, #tpu.memory_space<vmem>>, vector<1x64x128xf32>,
    return
  }
  func.func @transform_0(%arg0: i32) -> (i32, i32, i32, i32) {
    %c0_i32 = arith.constant 0 : i32
    %c0_i32_0 = arith.constant 0 : i32
    %c0_i32_1 = arith.constant 0 : i32
    %c0_i32_2 = arith.constant 0 : i32
    return %arg0, %c0_i32, %c0_i32_0, %c0_i32_1 : i32, i32, i32, i32
  }
  func.func @transform_1(%arg0: i32) -> (i32, i32, i32) {
    %c0_i32 = arith.constant 0 : i32
    %c0_i32_0 = arith.constant 0 : i32
    %c0_i32_1 = arith.constant 0 : i32
    return %arg0, %c0_i32, %c0_i32_0 : i32, i32, i32
  }
  func.func @transform_2(%arg0: i32) -> (i32, i32) {
    %c0_i32 = arith.constant 0 : i32
    %c0_i32_0 = arith.constant 0 : i32
    %c0_i32_1 = arith.constant 0 : i32
    return %c0_i32, %c0_i32_0 : i32, i32
  }
  func.func @transform_3(%arg0: i32) -> (i32, i32) {
    %c0_i32 = arith.constant 0 : i32
    %c0_i32_0 = arith.constant 0 : i32
    %c0_i32_1 = arith.constant 0 : i32
    return %c0_i32, %c0_i32_0 : i32, i32
  }
  func.func @transform_4(%arg0: i32) -> (i32, i32) {
    %c0_i32 = arith.constant 0 : i32
    %c0_i32_0 = arith.constant 0 : i32
    %c0_i32_1 = arith.constant 0 : i32
    return %c0_i32, %c0_i32_0 : i32, i32
  }
  func.func @transform_5(%arg0: i32) -> (i32, i32) {
    %c0_i32 = arith.constant 0 : i32
    %c0_i32_0 = arith.constant 0 : i32
    %c0_i32_1 = arith.constant 0 : i32
    return %c0_i32, %c0_i32_0 : i32, i32
  }
  func.func @transform_6(%arg0: i32) -> (i32, i32) {
    %c0_i32 = arith.constant 0 : i32
    %c0_i32_0 = arith.constant 0 : i32
    %c0_i32_1 = arith.constant 0 : i32
    return %c0_i32, %c0_i32_0 : i32, i32
  }
  func.func @transform_7(%arg0: i32) -> (i32, i32) {
    %c0_i32 = arith.constant 0 : i32
    %c0_i32_0 = arith.constant 0 : i32
    %c0_i32_1 = arith.constant 0 : i32
    return %c0_i32, %c0_i32_0 : i32, i32
  }
  func.func @transform_8(%arg0: i32) -> (i32, i32) {
    %c0_i32 = arith.constant 0 : i32
    %c0_i32_0 = arith.constant 0 : i32
    %c0_i32_1 = arith.constant 0 : i32
    return %c0_i32, %c0_i32_0 : i32, i32
  }
  func.func @transform_9(%arg0: i32) -> (i32, i32) {
    %c0_i32 = arith.constant 0 : i32
    %c0_i32_0 = arith.constant 0 : i32
    %c0_i32_1 = arith.constant 0 : i32
    return %c0_i32, %c0_i32_0 : i32, i32
  }
  func.func @transform_10(%arg0: i32) -> (i32, i32) {
    %c0_i32 = arith.constant 0 : i32
    %c0_i32_0 = arith.constant 0 : i32
    %c0_i32_1 = arith.constant 0 : i32
    return %c0_i32, %c0_i32_0 : i32, i32
  }
  func.func @transform_11(%arg0: i32) -> (i32, i32) {
    %c0_i32 = arith.constant 0 : i32
    %c0_i32_0 = arith.constant 0 : i32
    %c0_i32_1 = arith.constant 0 : i32
    return %c0_i32, %c0_i32_0 : i32, i32
  }
  func.func @transform_12(%arg0: i32) -> (i32, i32) {
    %c0_i32 = arith.constant 0 : i32
    %c0_i32_0 = arith.constant 0 : i32
    %c0_i32_1 = arith.constant 0 : i32
    return %c0_i32, %c0_i32_0 : i32, i32
  }
  func.func @transform_13(%arg0: i32) -> (i32, i32) {
    %c0_i32 = arith.constant 0 : i32
    %c0_i32_0 = arith.constant 0 : i32
    %c0_i32_1 = arith.constant 0 : i32
    return %c0_i32, %c0_i32_0 : i32, i32
  }
  func.func @transform_14(%arg0: i32) -> (i32, i32) {
    %c0_i32 = arith.constant 0 : i32
    %c0_i32_0 = arith.constant 0 : i32
    %c0_i32_1 = arith.constant 0 : i32
    return %c0_i32, %c0_i32_0 : i32, i32
  }
  func.func @transform_15(%arg0: i32) -> (i32, i32, i32) {
    %c0_i32 = arith.constant 0 : i32
    %c0_i32_0 = arith.constant 0 : i32
    %c0_i32_1 = arith.constant 0 : i32
    return %arg0, %c0_i32, %c0_i32_0 : i32, i32, i32
  }
}

</mosaic_0001>

<llo_original>
// kernel: efficientnet_features.2
$region0: #{efficientnet_features.2}
  #allocation0 [shape = 'u32[]', space=smem, size = 0x4, offset = 0x4, fixed_abs, tag = 'smem constant byte address 0x4 - core index']
  #allocation1 [shape = 'u32[72,128]{1,0:T(1,128)}', space=vmem, size = 0x9000, scoped, tag = 'internal scratch']
  %s0 = inlined_call_operand.vmem [shape: bf16[128,27], index: 0, kind: input, shape index: {}]
  %s1 = inlined_call_operand.vmem [shape: bf16[27,32], index: 1, kind: input, shape index: {}]
  %s2 = inlined_call_operand.vmem [shape: f32[1,32], index: 2, kind: input, shape index: {}]
  %s3 = inlined_call_operand.vmem [shape: f32[1,32], index: 3, kind: input, shape index: {}]
  %s4 = inlined_call_operand.vmem [shape: bf16[32,128], index: 4, kind: input, shape index: {}]
  %s5 = inlined_call_operand.vmem [shape: f32[1,128], index: 5, kind: input, shape index: {}]
  %s6 = inlined_call_operand.vmem [shape: f32[1,128], index: 6, kind: input, shape index: {}]
  %s7 = inlined_call_operand.vmem [shape: f32[128,32], index: 7, kind: output, shape index: {0}]
  %s8 = inlined_call_operand.vmem [shape: bf16[128,128], index: 8, kind: output, shape index: {1}]
  %9 = xla_tuple %s7, %s8
  %s10 = sld [smem:[#allocation0]]
  $region46: #{efficientnet_features.2} parent=0
    _
  %s12 = ssub.s32 1, %s10
  %s13 = scalar_select 0, %s12, %s10
  // Predicated region
  $region2: #{efficientnet_features.2} parent=0 // pred_check
    _
  $region3: #{efficientnet_features.2} parent=0 // pred_check_branch
    %15 = sbr.rel (0) target = $region5
  $region4: #{efficientnet_features.2} parent=0 // pred_region
    _
  $region5: #{efficientnet_features.2} parent=0 // pred_fallthru
    _
  // Predicated region
  $region6: #{efficientnet_features.2} parent=0 // pred_check
    _
  $region7: #{efficientnet_features.2} parent=0 // pred_check_branch
    %17 = sbr.rel (0) target = $region9
  $region8: #{efficientnet_features.2} parent=0 // pred_region
    _
  $region9: #{efficientnet_features.2} parent=0 // pred_fallthru
    _
  // Predicated region
  $region10: #{efficientnet_features.2} parent=0 // pred_check
    _
  $region11: #{efficientnet_features.2} parent=0 // pred_check_branch
    %19 = sbr.rel (0) target = $region13
  $region12: #{efficientnet_features.2} parent=0 // pred_region
    _
  $region13: #{efficientnet_features.2} parent=0 // pred_fallthru
    _
  // Predicated region
  $region14: #{efficientnet_features.2} parent=0 // pred_check
    _
  $region15: #{efficientnet_features.2} parent=0 // pred_check_branch
    %21 = sbr.rel (0) target = $region17
  $region16: #{efficientnet_features.2} parent=0 // pred_region
    _
  $region17: #{efficientnet_features.2} parent=0 // pred_fallthru
    _
  // Predicated region
  $region18: #{efficientnet_features.2} parent=0 // pred_check
    _
  $region19: #{efficientnet_features.2} parent=0 // pred_check_branch
    %23 = sbr.rel (0) target = $region21
  $region20: #{efficientnet_features.2} parent=0 // pred_region
    _
  $region21: #{efficientnet_features.2} parent=0 // pred_fallthru
    _
  // Predicated region
  $region22: #{efficientnet_features.2} parent=0 // pred_check
    _
  $region23: #{efficientnet_features.2} parent=0 // pred_check_branch
    %25 = sbr.rel (0) target = $region25
  $region24: #{efficientnet_features.2} parent=0 // pred_region
    _
  $region25: #{efficientnet_features.2} parent=0 // pred_fallthru
    _
  // Predicated region
  $region26: #{efficientnet_features.2} parent=0 // pred_check
    _
  $region27: #{efficientnet_features.2} parent=0 // pred_check_branch
    %27 = sbr.rel (0) target = $region29
  $region28: #{efficientnet_features.2} parent=0 // pred_region
    _
  $region29: #{efficientnet_features.2} parent=0 // pred_fallthru
    _
  %v29 = vld [vmem:[%s0] sm:$0xf]
  %v30 = vld [vmem:[%s0 + $0x4] sm:$0xf]
  %v31 = vld [vmem:[%s0 + $0x8] sm:$0xf]
  %v32 = vld [vmem:[%s0 + $0xc] sm:$0xf]
  %v33 = vld [vmem:[%s0 + $0x10] sm:$0xf]
  %v34 = vld [vmem:[%s0 + $0x14] sm:$0xf]
  %v35 = vld [vmem:[%s0 + $0x18] sm:$0xf]
  %v36 = vld [vmem:[%s0 + $0x1c] sm:$0xf]
  %v37 = vld [vmem:[%s0 + $0x20] sm:$0xf]
  %v38 = vld [vmem:[%s0 + $0x24] sm:$0xf]
  %v39 = vld [vmem:[%s0 + $0x28] sm:$0xf]
  %v40 = vld [vmem:[%s0 + $0x2c] sm:$0xf]
  %v41 = vld [vmem:[%s0 + $0x30] sm:$0xf]
  %v42 = vld [vmem:[%s0 + $0x34] sm:$0xf]
  %v43 = vld [vmem:[%s0 + $0x38] sm:$0xf]
  %v44 = vld [vmem:[%s0 + $0x3c] sm:$0xf]
  %v45 = vld [vmem:[%s1] sm:$0xf]
  %v46 = vld [vmem:[%s1 + $0x4] sm:$0xf]
  %v47 = vld [vmem:[%s1 + $0x8] sm:$0xf]
  %v48 = vld [vmem:[%s1 + $0xc] sm:$0x3]
  %v65 = vunpack.c.l.b16 %v29
  %v66 = vunpack.c.l.b16 %v30
  %v67 = vunpack.c.l.b16 %v31
  %v68 = vunpack.c.l.b16 %v32
  %v69 = vunpack.c.l.b16 %v33
  %v70 = vunpack.c.l.b16 %v34
  %v71 = vunpack.c.l.b16 %v35
  %v72 = vunpack.c.l.b16 %v36
  %v73 = vunpack.c.l.b16 %v37
  %v74 = vunpack.c.l.b16 %v38
  %v75 = vunpack.c.l.b16 %v39
  %v76 = vunpack.c.l.b16 %v40
  %v77 = vunpack.c.l.b16 %v41
  %v78 = vunpack.c.l.b16 %v42
  %v79 = vunpack.c.l.b16 %v43
  %v80 = vunpack.c.l.b16 %v44
  %v81 = vpack.c.b16 %v66, %v65
  %v82 = vpack.c.b16 %v68, %v67
  %v83 = vpack.c.b16 %v70, %v69
  %v84 = vpack.c.b16 %v72, %v71
  %v85 = vpack.c.b16 %v74, %v73
  %v86 = vpack.c.b16 %v76, %v75
  %v87 = vpack.c.b16 %v78, %v77
  %v88 = vpack.c.b16 %v80, %v79
  %v93 = vunpack.c.l.b16 %v45
  %v94 = vunpack.c.l.b16 %v46
  %v95 = vunpack.c.l.b16 %v47
  %v96 = vunpack.c.l.b16 %v48
  %v97 = vpack.c.b16 %v94, %v93
  %v98 = vpack.c.b16 %v96, %v95
  %vm100 = vcmask 220160
  %v102 = vsel %vm100, %v81, 0
  %v105 = vsel %vm100, %v82, 0
  %v108 = vsel %vm100, %v83, 0
  %v111 = vsel %vm100, %v84, 0
  %v114 = vsel %vm100, %v85, 0
  %v117 = vsel %vm100, %v86, 0
  %v120 = vsel %vm100, %v87, 0
  %v123 = vsel %vm100, %v88, 0
  %vm125 = vcmask 1044480
  %vm126 = vcmask 1045504
  %v127 = vsel %vm125, 4294967295, 65535
  %v128 = vsel %vm126, %v127, 0
  %v130 = vand.u32 %v98, %v128
  %132 = vmatpush.bf16.msra.mxu0 0
  %133 = vmatpush.bf16.msra.mxu0 0
  %134 = vmatpush.bf16.msra.mxu0 0
  %135 = vmatpush.bf16.msra.mxu0 0
  %136 = vmatpush.bf16.msra.mxu0 0
  %137 = vmatpush.bf16.msra.mxu0 0
  %138 = vmatpush.bf16.msra.mxu0 %v130
  %139 = vmatpush.bf16.msra.mxu0 %v97
  %140 = vmatmul.bf16.gmra.mxu0 %v102
  %v141 = vpop.f32.mrf.mxu0
  %v142 = vadd.f32 0.0, %v141
  %v143 = vpop.f32.mrf.mxu0
  %v144 = vadd.f32 0.0, %v143
  %145 = vmatmul.bf16.gmra.mxu0 %v105
  %v146 = vpop.f32.mrf.mxu0
  %v147 = vadd.f32 0.0, %v146
  %v148 = vpop.f32.mrf.mxu0
  %v149 = vadd.f32 0.0, %v148
  %150 = vmatmul.bf16.gmra.mxu0 %v108
  %v151 = vpop.f32.mrf.mxu0
  %v152 = vadd.f32 0.0, %v151
  %v153 = vpop.f32.mrf.mxu0
  %v154 = vadd.f32 0.0, %v153
  %155 = vmatmul.bf16.gmra.mxu0 %v111
  %v156 = vpop.f32.mrf.mxu0
  %v157 = vadd.f32 0.0, %v156
  %v158 = vpop.f32.mrf.mxu0
  %v159 = vadd.f32 0.0, %v158
  %160 = vmatmul.bf16.gmra.mxu0 %v114
  %v161 = vpop.f32.mrf.mxu0
  %v162 = vadd.f32 0.0, %v161
  %v163 = vpop.f32.mrf.mxu0
  %v164 = vadd.f32 0.0, %v163
  %165 = vmatmul.bf16.gmra.mxu0 %v117
  %v166 = vpop.f32.mrf.mxu0
  %v167 = vadd.f32 0.0, %v166
  %v168 = vpop.f32.mrf.mxu0
  %v169 = vadd.f32 0.0, %v168
  %170 = vmatmul.bf16.gmra.mxu0 %v120
  %v171 = vpop.f32.mrf.mxu0
  %v172 = vadd.f32 0.0, %v171
  %v173 = vpop.f32.mrf.mxu0
  %v174 = vadd.f32 0.0, %v173
  %175 = vmatmul.bf16.gmra.mxu0 %v123
  %v176 = vpop.f32.mrf.mxu0
  %v177 = vadd.f32 0.0, %v176
  %v178 = vpop.f32.mrf.mxu0
  %v179 = vadd.f32 0.0, %v178
  %180 = vdwg.mxu0
  %v181 = vld [vmem:[%s2] sm:$0x1]
  %v183 = vperm.slane %v181, 0
  %v185 = vmul.f32 %v142, %v183
  %v186 = vmul.f32 %v144, %v183
  %v187 = vmul.f32 %v147, %v183
  %v188 = vmul.f32 %v149, %v183
  %v189 = vmul.f32 %v152, %v183
  %v190 = vmul.f32 %v154, %v183
  %v191 = vmul.f32 %v157, %v183
  %v192 = vmul.f32 %v159, %v183
  %v193 = vmul.f32 %v162, %v183
  %v194 = vmul.f32 %v164, %v183
  %v195 = vmul.f32 %v167, %v183
  %v196 = vmul.f32 %v169, %v183
  %v197 = vmul.f32 %v172, %v183
  %v198 = vmul.f32 %v174, %v183
  %v199 = vmul.f32 %v177, %v183
  %v200 = vmul.f32 %v179, %v183
  %v201 = vld [vmem:[%s3] sm:$0x1]
  %v203 = vperm.slane %v201, 0
  %v205 = vadd.f32 %v185, %v203
  %v206 = vadd.f32 %v186, %v203
  %v207 = vadd.f32 %v187, %v203
  %v208 = vadd.f32 %v188, %v203
  %v209 = vadd.f32 %v189, %v203
  %v210 = vadd.f32 %v190, %v203
  %v211 = vadd.f32 %v191, %v203
  %v212 = vadd.f32 %v192, %v203
  %v213 = vadd.f32 %v193, %v203
  %v214 = vadd.f32 %v194, %v203
  %v215 = vadd.f32 %v195, %v203
  %v216 = vadd.f32 %v196, %v203
  %v217 = vadd.f32 %v197, %v203
  %v218 = vadd.f32 %v198, %v203
  %v219 = vadd.f32 %v199, %v203
  %v220 = vadd.f32 %v200, %v203
  %v221 = vxor.u32 %v205, 2147483648
  %v222 = vxor.u32 %v206, 2147483648
  %v223 = vxor.u32 %v207, 2147483648
  %v224 = vxor.u32 %v208, 2147483648
  %v225 = vxor.u32 %v209, 2147483648
  %v226 = vxor.u32 %v210, 2147483648
  %v227 = vxor.u32 %v211, 2147483648
  %v228 = vxor.u32 %v212, 2147483648
  %v229 = vxor.u32 %v213, 2147483648
  %v230 = vxor.u32 %v214, 2147483648
  %v231 = vxor.u32 %v215, 2147483648
  %v232 = vxor.u32 %v216, 2147483648
  %v233 = vxor.u32 %v217, 2147483648
  %v234 = vxor.u32 %v218, 2147483648
  %v235 = vxor.u32 %v219, 2147483648
  %v236 = vxor.u32 %v220, 2147483648
  %v237 = vmul.f32 %v221, 1.442695
  %v238 = vpow.pop %v237
  %v239 = vmul.f32 %v222, 1.442695
  %v240 = vpow.pop %v239
  %v241 = vmul.f32 %v223, 1.442695
  %v242 = vpow.pop %v241
  %v243 = vmul.f32 %v224, 1.442695
  %v244 = vpow.pop %v243
  %v245 = vmul.f32 %v225, 1.442695
  %v246 = vpow.pop %v245
  %v247 = vmul.f32 %v226, 1.442695
  %v248 = vpow.pop %v247
  %v249 = vmul.f32 %v227, 1.442695
  %v250 = vpow.pop %v249
  %v251 = vmul.f32 %v228, 1.442695
  %v252 = vpow.pop %v251
  %v253 = vmul.f32 %v229, 1.442695
  %v254 = vpow.pop %v253
  %v255 = vmul.f32 %v230, 1.442695
  %v256 = vpow.pop %v255
  %v257 = vmul.f32 %v231, 1.442695
  %v258 = vpow.pop %v257
  %v259 = vmul.f32 %v232, 1.442695
  %v260 = vpow.pop %v259
  %v261 = vmul.f32 %v233, 1.442695
  %v262 = vpow.pop %v261
  %v263 = vmul.f32 %v234, 1.442695
  %v264 = vpow.pop %v263
  %v265 = vmul.f32 %v235, 1.442695
  %v266 = vpow.pop %v265
  %v267 = vmul.f32 %v236, 1.442695
  %v268 = vpow.pop %v267
  %v269 = vadd.f32 %v238, 1.0
  %v270 = vadd.f32 %v240, 1.0
  %v271 = vadd.f32 %v242, 1.0
  %v272 = vadd.f32 %v244, 1.0
  %v273 = vadd.f32 %v246, 1.0
  %v274 = vadd.f32 %v248, 1.0
  %v275 = vadd.f32 %v250, 1.0
  %v276 = vadd.f32 %v252, 1.0
  %v277 = vadd.f32 %v254, 1.0
  %v278 = vadd.f32 %v256, 1.0
  %v279 = vadd.f32 %v258, 1.0
  %v280 = vadd.f32 %v260, 1.0
  %v281 = vadd.f32 %v262, 1.0
  %v282 = vadd.f32 %v264, 1.0
  %v283 = vadd.f32 %v266, 1.0
  %v284 = vadd.f32 %v268, 1.0
  %v285 = vrcp.pop %v269
  %v286 = vmul.f32 %v269, %v285
  %v287 = vsub.f32 1.0, %v286
  %v288 = vmul.f32 %v285, %v287
  %v289 = vadd.f32 %v285, %v288
  %vm290 = vweird.f32 %v269
  %vm291 = vweird.f32 %v285
  %vm292 = vmor %vm290, %vm291
  %v293 = vsel %vm292, %v285, %v289
  %v294 = vand.u32 2147483647, %v269
  %vm295 = vcmp.eq.f32.partialorder %v294, 8.507059e+37
  %v296 = vand.u32 %v269, 2147483648
  %v297 = vor.u32 1.1754944e-38, %v296
  %v298 = vsel %vm295, %v297, %v293
  %v299 = vmul.f32 1.0, %v298
  %v300 = vrcp.pop %v270
  %v301 = vmul.f32 %v270, %v300
  %v302 = vsub.f32 1.0, %v301
  %v303 = vmul.f32 %v300, %v302
  %v304 = vadd.f32 %v300, %v303
  %vm305 = vweird.f32 %v270
  %vm306 = vweird.f32 %v300
  %vm307 = vmor %vm305, %vm306
  %v308 = vsel %vm307, %v300, %v304
  %v309 = vand.u32 2147483647, %v270
  %vm310 = vcmp.eq.f32.partialorder %v309, 8.507059e+37
  %v311 = vand.u32 %v270, 2147483648
  %v312 = vor.u32 1.1754944e-38, %v311
  %v313 = vsel %vm310, %v312, %v308
  %v314 = vmul.f32 1.0, %v313
  %v315 = vrcp.pop %v271
  %v316 = vmul.f32 %v271, %v315
  %v317 = vsub.f32 1.0, %v316
  %v318 = vmul.f32 %v315, %v317
  %v319 = vadd.f32 %v315, %v318
  %vm320 = vweird.f32 %v271
  %vm321 = vweird.f32 %v315
  %vm322 = vmor %vm320, %vm321
  %v323 = vsel %vm322, %v315, %v319
  %v324 = vand.u32 2147483647, %v271
  %vm325 = vcmp.eq.f32.partialorder %v324, 8.507059e+37
  %v326 = vand.u32 %v271, 2147483648
  %v327 = vor.u32 1.1754944e-38, %v326
  %v328 = vsel %vm325, %v327, %v323
  %v329 = vmul.f32 1.0, %v328
  %v330 = vrcp.pop %v272
  %v331 = vmul.f32 %v272, %v330
  %v332 = vsub.f32 1.0, %v331
  %v333 = vmul.f32 %v330, %v332
  %v334 = vadd.f32 %v330, %v333
  %vm335 = vweird.f32 %v272
  %vm336 = vweird.f32 %v330
  %vm337 = vmor %vm335, %vm336
  %v338 = vsel %vm337, %v330, %v334
  %v339 = vand.u32 2147483647, %v272
  %vm340 = vcmp.eq.f32.partialorder %v339, 8.507059e+37
  %v341 = vand.u32 %v272, 2147483648
  %v342 = vor.u32 1.1754944e-38, %v341
  %v343 = vsel %vm340, %v342, %v338
  %v344 = vmul.f32 1.0, %v343
  %v345 = vrcp.pop %v273
  %v346 = vmul.f32 %v273, %v345
  %v347 = vsub.f32 1.0, %v346
  %v348 = vmul.f32 %v345, %v347
  %v349 = vadd.f32 %v345, %v348
  %vm350 = vweird.f32 %v273
  %vm351 = vweird.f32 %v345
  %vm352 = vmor %vm350, %vm351
  %v353 = vsel %vm352, %v345, %v349
  %v354 = vand.u32 2147483647, %v273
  %vm355 = vcmp.eq.f32.partialorder %v354, 8.507059e+37
  %v356 = vand.u32 %v273, 2147483648
  %v357 = vor.u32 1.1754944e-38, %v356
  %v358 = vsel %vm355, %v357, %v353
  %v359 = vmul.f32 1.0, %v358
  %v360 = vrcp.pop %v274
  %v361 = vmul.f32 %v274, %v360
  %v362 = vsub.f32 1.0, %v361
  %v363 = vmul.f32 %v360, %v362
  %v364 = vadd.f32 %v360, %v363
  %vm365 = vweird.f32 %v274
  %vm366 = vweird.f32 %v360
  %vm367 = vmor %vm365, %vm366
  %v368 = vsel %vm367, %v360, %v364
  %v369 = vand.u32 2147483647, %v274
  %vm370 = vcmp.eq.f32.partialorder %v369, 8.507059e+37
  %v371 = vand.u32 %v274, 2147483648
  %v372 = vor.u32 1.1754944e-38, %v371
  %v373 = vsel %vm370, %v372, %v368
  %v374 = vmul.f32 1.0, %v373
  %v375 = vrcp.pop %v275
  %v376 = vmul.f32 %v275, %v375
  %v377 = vsub.f32 1.0, %v376
  %v378 = vmul.f32 %v375, %v377
  %v379 = vadd.f32 %v375, %v378
  %vm380 = vweird.f32 %v275
  %vm381 = vweird.f32 %v375
  %vm382 = vmor %vm380, %vm381
  %v383 = vsel %vm382, %v375, %v379
  %v384 = vand.u32 2147483647, %v275
  %vm385 = vcmp.eq.f32.partialorder %v384, 8.507059e+37
  %v386 = vand.u32 %v275, 2147483648
  %v387 = vor.u32 1.1754944e-38, %v386
  %v388 = vsel %vm385, %v387, %v383
  %v389 = vmul.f32 1.0, %v388
  %v390 = vrcp.pop %v276
  %v391 = vmul.f32 %v276, %v390
  %v392 = vsub.f32 1.0, %v391
  %v393 = vmul.f32 %v390, %v392
  %v394 = vadd.f32 %v390, %v393
  %vm395 = vweird.f32 %v276
  %vm396 = vweird.f32 %v390
  %vm397 = vmor %vm395, %vm396
  %v398 = vsel %vm397, %v390, %v394
  %v399 = vand.u32 2147483647, %v276
  %vm400 = vcmp.eq.f32.partialorder %v399, 8.507059e+37
  %v401 = vand.u32 %v276, 2147483648
  %v402 = vor.u32 1.1754944e-38, %v401
  %v403 = vsel %vm400, %v402, %v398
  %v404 = vmul.f32 1.0, %v403
  %v405 = vrcp.pop %v277
  %v406 = vmul.f32 %v277, %v405
  %v407 = vsub.f32 1.0, %v406
  %v408 = vmul.f32 %v405, %v407
  %v409 = vadd.f32 %v405, %v408
  %vm410 = vweird.f32 %v277
  %vm411 = vweird.f32 %v405
  %vm412 = vmor %vm410, %vm411
  %v413 = vsel %vm412, %v405, %v409
  %v414 = vand.u32 2147483647, %v277
  %vm415 = vcmp.eq.f32.partialorder %v414, 8.507059e+37
  %v416 = vand.u32 %v277, 2147483648
  %v417 = vor.u32 1.1754944e-38, %v416
  %v418 = vsel %vm415, %v417, %v413
  %v419 = vmul.f32 1.0, %v418
  %v420 = vrcp.pop %v278
  %v421 = vmul.f32 %v278, %v420
  %v422 = vsub.f32 1.0, %v421
  %v423 = vmul.f32 %v420, %v422
  %v424 = vadd.f32 %v420, %v423
  %vm425 = vweird.f32 %v278
  %vm426 = vweird.f32 %v420
  %vm427 = vmor %vm425, %vm426
  %v428 = vsel %vm427, %v420, %v424
  %v429 = vand.u32 2147483647, %v278
  %vm430 = vcmp.eq.f32.partialorder %v429, 8.507059e+37
  %v431 = vand.u32 %v278, 2147483648
  %v432 = vor.u32 1.1754944e-38, %v431
  %v433 = vsel %vm430, %v432, %v428
  %v434 = vmul.f32 1.0, %v433
  %v435 = vrcp.pop %v279
  %v436 = vmul.f32 %v279, %v435
  %v437 = vsub.f32 1.0, %v436
  %v438 = vmul.f32 %v435, %v437
  %v439 = vadd.f32 %v435, %v438
  %vm440 = vweird.f32 %v279
  %vm441 = vweird.f32 %v435
  %vm442 = vmor %vm440, %vm441
  %v443 = vsel %vm442, %v435, %v439
  %v444 = vand.u32 2147483647, %v279
  %vm445 = vcmp.eq.f32.partialorder %v444, 8.507059e+37
  %v446 = vand.u32 %v279, 2147483648
  %v447 = vor.u32 1.1754944e-38, %v446
  %v448 = vsel %vm445, %v447, %v443
  %v449 = vmul.f32 1.0, %v448
  %v450 = vrcp.pop %v280
  %v451 = vmul.f32 %v280, %v450
  %v452 = vsub.f32 1.0, %v451
  %v453 = vmul.f32 %v450, %v452
  %v454 = vadd.f32 %v450, %v453
  %vm455 = vweird.f32 %v280
  %vm456 = vweird.f32 %v450
  %vm457 = vmor %vm455, %vm456
  %v458 = vsel %vm457, %v450, %v454
  %v459 = vand.u32 2147483647, %v280
  %vm460 = vcmp.eq.f32.partialorder %v459, 8.507059e+37
  %v461 = vand.u32 %v280, 2147483648
  %v462 = vor.u32 1.1754944e-38, %v461
  %v463 = vsel %vm460, %v462, %v458
  %v464 = vmul.f32 1.0, %v463
  %v465 = vrcp.pop %v281
  %v466 = vmul.f32 %v281, %v465
  %v467 = vsub.f32 1.0, %v466
  %v468 = vmul.f32 %v465, %v467
  %v469 = vadd.f32 %v465, %v468
  %vm470 = vweird.f32 %v281
  %vm471 = vweird.f32 %v465
  %vm472 = vmor %vm470, %vm471
  %v473 = vsel %vm472, %v465, %v469
  %v474 = vand.u32 2147483647, %v281
  %vm475 = vcmp.eq.f32.partialorder %v474, 8.507059e+37
  %v476 = vand.u32 %v281, 2147483648
  %v477 = vor.u32 1.1754944e-38, %v476
  %v478 = vsel %vm475, %v477, %v473
  %v479 = vmul.f32 1.0, %v478
  %v480 = vrcp.pop %v282
  %v481 = vmul.f32 %v282, %v480
  %v482 = vsub.f32 1.0, %v481
  %v483 = vmul.f32 %v480, %v482
  %v484 = vadd.f32 %v480, %v483
  %vm485 = vweird.f32 %v282
  %vm486 = vweird.f32 %v480
  %vm487 = vmor %vm485, %vm486
  %v488 = vsel %vm487, %v480, %v484
  %v489 = vand.u32 2147483647, %v282
  %vm490 = vcmp.eq.f32.partialorder %v489, 8.507059e+37
  %v491 = vand.u32 %v282, 2147483648
  %v492 = vor.u32 1.1754944e-38, %v491
  %v493 = vsel %vm490, %v492, %v488
  %v494 = vmul.f32 1.0, %v493
  %v495 = vrcp.pop %v283
  %v496 = vmul.f32 %v283, %v495
  %v497 = vsub.f32 1.0, %v496
  %v498 = vmul.f32 %v495, %v497
  %v499 = vadd.f32 %v495, %v498
  %vm500 = vweird.f32 %v283
  %vm501 = vweird.f32 %v495
  %vm502 = vmor %vm500, %vm501
  %v503 = vsel %vm502, %v495, %v499
  %v504 = vand.u32 2147483647, %v283
  %vm505 = vcmp.eq.f32.partialorder %v504, 8.507059e+37
  %v506 = vand.u32 %v283, 2147483648
  %v507 = vor.u32 1.1754944e-38, %v506
  %v508 = vsel %vm505, %v507, %v503
  %v509 = vmul.f32 1.0, %v508
  %v510 = vrcp.pop %v284
  %v511 = vmul.f32 %v284, %v510
  %v512 = vsub.f32 1.0, %v511
  %v513 = vmul.f32 %v510, %v512
  %v514 = vadd.f32 %v510, %v513
  %vm515 = vweird.f32 %v284
  %vm516 = vweird.f32 %v510
  %vm517 = vmor %vm515, %vm516
  %v518 = vsel %vm517, %v510, %v514
  %v519 = vand.u32 2147483647, %v284
  %vm520 = vcmp.eq.f32.partialorder %v519, 8.507059e+37
  %v521 = vand.u32 %v284, 2147483648
  %v522 = vor.u32 1.1754944e-38, %v521
  %v523 = vsel %vm520, %v522, %v518
  %v524 = vmul.f32 1.0, %v523
  %v525 = vmul.f32 %v205, %v299
  %v526 = vmul.f32 %v206, %v314
  %v527 = vmul.f32 %v207, %v329
  %v528 = vmul.f32 %v208, %v344
  %v529 = vmul.f32 %v209, %v359
  %v530 = vmul.f32 %v210, %v374
  %v531 = vmul.f32 %v211, %v389
  %v532 = vmul.f32 %v212, %v404
  %v533 = vmul.f32 %v213, %v419
  %v534 = vmul.f32 %v214, %v434
  %v535 = vmul.f32 %v215, %v449
  %v536 = vmul.f32 %v216, %v464
  %v537 = vmul.f32 %v217, %v479
  %v538 = vmul.f32 %v218, %v494
  %v539 = vmul.f32 %v219, %v509
  %v540 = vmul.f32 %v220, %v524
  %vm541 = vcmask 261120
  %542 = vst.msk [vmem:[%s7] sm:$0xff] %vm541, %v525
  %543 = vst.msk [vmem:[%s7 + $0x8] sm:$0xff] %vm541, %v526
  %544 = vst.msk [vmem:[%s7 + $0x10] sm:$0xff] %vm541, %v527
  %545 = vst.msk [vmem:[%s7 + $0x18] sm:$0xff] %vm541, %v528
  %546 = vst.msk [vmem:[%s7 + $0x20] sm:$0xff] %vm541, %v529
  %547 = vst.msk [vmem:[%s7 + $0x28] sm:$0xff] %vm541, %v530
  %548 = vst.msk [vmem:[%s7 + $0x30] sm:$0xff] %vm541, %v531
  %549 = vst.msk [vmem:[%s7 + $0x38] sm:$0xff] %vm541, %v532
  %550 = vst.msk [vmem:[%s7 + $0x40] sm:$0xff] %vm541, %v533
  %551 = vst.msk [vmem:[%s7 + $0x48] sm:$0xff] %vm541, %v534
  %552 = vst.msk [vmem:[%s7 + $0x50] sm:$0xff] %vm541, %v535
  %553 = vst.msk [vmem:[%s7 + $0x58] sm:$0xff] %vm541, %v536
  %554 = vst.msk [vmem:[%s7 + $0x60] sm:$0xff] %vm541, %v537
  %555 = vst.msk [vmem:[%s7 + $0x68] sm:$0xff] %vm541, %v538
  %556 = vst.msk [vmem:[%s7 + $0x70] sm:$0xff] %vm541, %v539
  %557 = vst.msk [vmem:[%s7 + $0x78] sm:$0xff] %vm541, %v540
  %v558 = vpack.c.bf16 %v526, %v525
  %v559 = vpack.c.bf16 %v528, %v527
  %v560 = vpack.c.bf16 %v530, %v529
  %v561 = vpack.c.bf16 %v532, %v531
  %v562 = vpack.c.bf16 %v534, %v533
  %v563 = vpack.c.bf16 %v536, %v535
  %v564 = vpack.c.bf16 %v538, %v537
  %v565 = vpack.c.bf16 %v540, %v539
  %v566 = vld [vmem:[%s4] sm:$0xf]
  %v567 = vld [vmem:[%s4 + $0x4] sm:$0xf]
  %v568 = vld [vmem:[%s4 + $0x8] sm:$0xf]
  %v569 = vld [vmem:[%s4 + $0xc] sm:$0xf]
  %v574 = vunpack.c.l.b16 %v566
  %v575 = vunpack.c.l.b16 %v567
  %v576 = vunpack.c.l.b16 %v568
  %v577 = vunpack.c.l.b16 %v569
  %v578 = vpack.c.b16 %v575, %v574
  %v579 = vpack.c.b16 %v577, %v576
  %v583 = vsel %vm541, %v558, 0
  %v586 = vsel %vm541, %v559, 0
  %v589 = vsel %vm541, %v560, 0
  %v592 = vsel %vm541, %v561, 0
  %v595 = vsel %vm541, %v562, 0
  %v598 = vsel %vm541, %v563, 0
  %v601 = vsel %vm541, %v564, 0
  %v604 = vsel %vm541, %v565, 0
  %606 = vmatpush.bf16.msra.mxu0 0
  %607 = vmatpush.bf16.msra.mxu0 0
  %608 = vmatpush.bf16.msra.mxu0 0
  %609 = vmatpush.bf16.msra.mxu0 0
  %610 = vmatpush.bf16.msra.mxu0 0
  %611 = vmatpush.bf16.msra.mxu0 0
  %612 = vmatpush.bf16.msra.mxu0 %v579
  %613 = vmatpush.bf16.msra.mxu0 %v578
  %614 = vmatmul.bf16.gmra.mxu0 %v583
  %v615 = vpop.f32.mrf.mxu0
  %v616 = vadd.f32 0.0, %v615
  %v617 = vpop.f32.mrf.mxu0
  %v618 = vadd.f32 0.0, %v617
  %619 = vmatmul.bf16.gmra.mxu0 %v586
  %v620 = vpop.f32.mrf.mxu0
  %v621 = vadd.f32 0.0, %v620
  %v622 = vpop.f32.mrf.mxu0
  %v623 = vadd.f32 0.0, %v622
  %624 = vmatmul.bf16.gmra.mxu0 %v589
  %v625 = vpop.f32.mrf.mxu0
  %v626 = vadd.f32 0.0, %v625
  %v627 = vpop.f32.mrf.mxu0
  %v628 = vadd.f32 0.0, %v627
  %629 = vmatmul.bf16.gmra.mxu0 %v592
  %v630 = vpop.f32.mrf.mxu0
  %v631 = vadd.f32 0.0, %v630
  %v632 = vpop.f32.mrf.mxu0
  %v633 = vadd.f32 0.0, %v632
  %634 = vmatmul.bf16.gmra.mxu0 %v595
  %v635 = vpop.f32.mrf.mxu0
  %v636 = vadd.f32 0.0, %v635
  %v637 = vpop.f32.mrf.mxu0
  %v638 = vadd.f32 0.0, %v637
  %639 = vmatmul.bf16.gmra.mxu0 %v598
  %v640 = vpop.f32.mrf.mxu0
  %v641 = vadd.f32 0.0, %v640
  %v642 = vpop.f32.mrf.mxu0
  %v643 = vadd.f32 0.0, %v642
  %644 = vmatmul.bf16.gmra.mxu0 %v601
  %v645 = vpop.f32.mrf.mxu0
  %v646 = vadd.f32 0.0, %v645
  %v647 = vpop.f32.mrf.mxu0
  %v648 = vadd.f32 0.0, %v647
  %649 = vmatmul.bf16.gmra.mxu0 %v604
  %v650 = vpop.f32.mrf.mxu0
  %v651 = vadd.f32 0.0, %v650
  %v652 = vpop.f32.mrf.mxu0
  %v653 = vadd.f32 0.0, %v652
  %654 = vdwg.mxu0
  %v655 = vld [vmem:[%s5] sm:$0x1]
  %v657 = vperm.slane %v655, 0
  %v659 = vmul.f32 %v616, %v657
  %v660 = vmul.f32 %v618, %v657
  %v661 = vmul.f32 %v621, %v657
  %v662 = vmul.f32 %v623, %v657
  %v663 = vmul.f32 %v626, %v657
  %v664 = vmul.f32 %v628, %v657
  %v665 = vmul.f32 %v631, %v657
  %v666 = vmul.f32 %v633, %v657
  %v667 = vmul.f32 %v636, %v657
  %v668 = vmul.f32 %v638, %v657
  %v669 = vmul.f32 %v641, %v657
  %v670 = vmul.f32 %v643, %v657
  %v671 = vmul.f32 %v646, %v657
  %v672 = vmul.f32 %v648, %v657
  %v673 = vmul.f32 %v651, %v657
  %v674 = vmul.f32 %v653, %v657
  %v675 = vld [vmem:[%s6] sm:$0x1]
  %v677 = vperm.slane %v675, 0
  %v679 = vadd.f32 %v659, %v677
  %v680 = vadd.f32 %v660, %v677
  %v681 = vadd.f32 %v661, %v677
  %v682 = vadd.f32 %v662, %v677
  %v683 = vadd.f32 %v663, %v677
  %v684 = vadd.f32 %v664, %v677
  %v685 = vadd.f32 %v665, %v677
  %v686 = vadd.f32 %v666, %v677
  %v687 = vadd.f32 %v667, %v677
  %v688 = vadd.f32 %v668, %v677
  %v689 = vadd.f32 %v669, %v677
  %v690 = vadd.f32 %v670, %v677
  %v691 = vadd.f32 %v671, %v677
  %v692 = vadd.f32 %v672, %v677
  %v693 = vadd.f32 %v673, %v677
  %v694 = vadd.f32 %v674, %v677
  %v695 = vxor.u32 %v679, 2147483648
  %v696 = vxor.u32 %v680, 2147483648
  %v697 = vxor.u32 %v681, 2147483648
  %v698 = vxor.u32 %v682, 2147483648
  %v699 = vxor.u32 %v683, 2147483648
  %v700 = vxor.u32 %v684, 2147483648
  %v701 = vxor.u32 %v685, 2147483648
  %v702 = vxor.u32 %v686, 2147483648
  %v703 = vxor.u32 %v687, 2147483648
  %v704 = vxor.u32 %v688, 2147483648
  %v705 = vxor.u32 %v689, 2147483648
  %v706 = vxor.u32 %v690, 2147483648
  %v707 = vxor.u32 %v691, 2147483648
  %v708 = vxor.u32 %v692, 2147483648
  %v709 = vxor.u32 %v693, 2147483648
  %v710 = vxor.u32 %v694, 2147483648
  %v711 = vmul.f32 %v695, 1.442695
  %v712 = vpow.pop %v711
  %v713 = vmul.f32 %v696, 1.442695
  %v714 = vpow.pop %v713
  %v715 = vmul.f32 %v697, 1.442695
  %v716 = vpow.pop %v715
  %v717 = vmul.f32 %v698, 1.442695
  %v718 = vpow.pop %v717
  %v719 = vmul.f32 %v699, 1.442695
  %v720 = vpow.pop %v719
  %v721 = vmul.f32 %v700, 1.442695
  %v722 = vpow.pop %v721
  %v723 = vmul.f32 %v701, 1.442695
  %v724 = vpow.pop %v723
  %v725 = vmul.f32 %v702, 1.442695
  %v726 = vpow.pop %v725
  %v727 = vmul.f32 %v703, 1.442695
  %v728 = vpow.pop %v727
  %v729 = vmul.f32 %v704, 1.442695
  %v730 = vpow.pop %v729
  %v731 = vmul.f32 %v705, 1.442695
  %v732 = vpow.pop %v731
  %v733 = vmul.f32 %v706, 1.442695
  %v734 = vpow.pop %v733
  %v735 = vmul.f32 %v707, 1.442695
  %v736 = vpow.pop %v735
  %v737 = vmul.f32 %v708, 1.442695
  %v738 = vpow.pop %v737
  %v739 = vmul.f32 %v709, 1.442695
  %v740 = vpow.pop %v739
  %v741 = vmul.f32 %v710, 1.442695
  %v742 = vpow.pop %v741
  %v743 = vadd.f32 %v712, 1.0
  %v744 = vadd.f32 %v714, 1.0
  %v745 = vadd.f32 %v716, 1.0
  %v746 = vadd.f32 %v718, 1.0
  %v747 = vadd.f32 %v720, 1.0
  %v748 = vadd.f32 %v722, 1.0
  %v749 = vadd.f32 %v724, 1.0
  %v750 = vadd.f32 %v726, 1.0
  %v751 = vadd.f32 %v728, 1.0
  %v752 = vadd.f32 %v730, 1.0
  %v753 = vadd.f32 %v732, 1.0
  %v754 = vadd.f32 %v734, 1.0
  %v755 = vadd.f32 %v736, 1.0
  %v756 = vadd.f32 %v738, 1.0
  %v757 = vadd.f32 %v740, 1.0
  %v758 = vadd.f32 %v742, 1.0
  %v759 = vrcp.pop %v743
  %v760 = vmul.f32 %v743, %v759
  %v761 = vsub.f32 1.0, %v760
  %v762 = vmul.f32 %v759, %v761
  %v763 = vadd.f32 %v759, %v762
  %vm764 = vweird.f32 %v743
  %vm765 = vweird.f32 %v759
  %vm766 = vmor %vm764, %vm765
  %v767 = vsel %vm766, %v759, %v763
  %v768 = vand.u32 2147483647, %v743
  %vm769 = vcmp.eq.f32.partialorder %v768, 8.507059e+37
  %v770 = vand.u32 %v743, 2147483648
  %v771 = vor.u32 1.1754944e-38, %v770
  %v772 = vsel %vm769, %v771, %v767
  %v773 = vmul.f32 1.0, %v772
  %v774 = vrcp.pop %v744
  %v775 = vmul.f32 %v744, %v774
  %v776 = vsub.f32 1.0, %v775
  %v777 = vmul.f32 %v774, %v776
  %v778 = vadd.f32 %v774, %v777
  %vm779 = vweird.f32 %v744
  %vm780 = vweird.f32 %v774
  %vm781 = vmor %vm779, %vm780
  %v782 = vsel %vm781, %v774, %v778
  %v783 = vand.u32 2147483647, %v744
  %vm784 = vcmp.eq.f32.partialorder %v783, 8.507059e+37
  %v785 = vand.u32 %v744, 2147483648
  %v786 = vor.u32 1.1754944e-38, %v785
  %v787 = vsel %vm784, %v786, %v782
  %v788 = vmul.f32 1.0, %v787
  %v789 = vrcp.pop %v745
  %v790 = vmul.f32 %v745, %v789
  %v791 = vsub.f32 1.0, %v790
  %v792 = vmul.f32 %v789, %v791
  %v793 = vadd.f32 %v789, %v792
  %vm794 = vweird.f32 %v745
  %vm795 = vweird.f32 %v789
  %vm796 = vmor %vm794, %vm795
  %v797 = vsel %vm796, %v789, %v793
  %v798 = vand.u32 2147483647, %v745
  %vm799 = vcmp.eq.f32.partialorder %v798, 8.507059e+37
  %v800 = vand.u32 %v745, 2147483648
  %v801 = vor.u32 1.1754944e-38, %v800
  %v802 = vsel %vm799, %v801, %v797
  %v803 = vmul.f32 1.0, %v802
  %v804 = vrcp.pop %v746
  %v805 = vmul.f32 %v746, %v804
  %v806 = vsub.f32 1.0, %v805
  %v807 = vmul.f32 %v804, %v806
  %v808 = vadd.f32 %v804, %v807
  %vm809 = vweird.f32 %v746
  %vm810 = vweird.f32 %v804
  %vm811 = vmor %vm809, %vm810
  %v812 = vsel %vm811, %v804, %v808
  %v813 = vand.u32 2147483647, %v746
  %vm814 = vcmp.eq.f32.partialorder %v813, 8.507059e+37
  %v815 = vand.u32 %v746, 2147483648
  %v816 = vor.u32 1.1754944e-38, %v815
  %v817 = vsel %vm814, %v816, %v812
  %v818 = vmul.f32 1.0, %v817
  %v819 = vrcp.pop %v747
  %v820 = vmul.f32 %v747, %v819
  %v821 = vsub.f32 1.0, %v820
  %v822 = vmul.f32 %v819, %v821
  %v823 = vadd.f32 %v819, %v822
  %vm824 = vweird.f32 %v747
  %vm825 = vweird.f32 %v819
  %vm826 = vmor %vm824, %vm825
  %v827 = vsel %vm826, %v819, %v823
  %v828 = vand.u32 2147483647, %v747
  %vm829 = vcmp.eq.f32.partialorder %v828, 8.507059e+37
  %v830 = vand.u32 %v747, 2147483648
  %v831 = vor.u32 1.1754944e-38, %v830
  %v832 = vsel %vm829, %v831, %v827
  %v833 = vmul.f32 1.0, %v832
  %v834 = vrcp.pop %v748
  %v835 = vmul.f32 %v748, %v834
  %v836 = vsub.f32 1.0, %v835
  %v837 = vmul.f32 %v834, %v836
  %v838 = vadd.f32 %v834, %v837
  %vm839 = vweird.f32 %v748
  %vm840 = vweird.f32 %v834
  %vm841 = vmor %vm839, %vm840
  %v842 = vsel %vm841, %v834, %v838
  %v843 = vand.u32 2147483647, %v748
  %vm844 = vcmp.eq.f32.partialorder %v843, 8.507059e+37
  %v845 = vand.u32 %v748, 2147483648
  %v846 = vor.u32 1.1754944e-38, %v845
  %v847 = vsel %vm844, %v846, %v842
  %v848 = vmul.f32 1.0, %v847
  %v849 = vrcp.pop %v749
  %v850 = vmul.f32 %v749, %v849
  %v851 = vsub.f32 1.0, %v850
  %v852 = vmul.f32 %v849, %v851
  %v853 = vadd.f32 %v849, %v852
  %vm854 = vweird.f32 %v749
  %vm855 = vweird.f32 %v849
  %vm856 = vmor %vm854, %vm855
  %v857 = vsel %vm856, %v849, %v853
  %v858 = vand.u32 2147483647, %v749
  %vm859 = vcmp.eq.f32.partialorder %v858, 8.507059e+37
  %v860 = vand.u32 %v749, 2147483648
  %v861 = vor.u32 1.1754944e-38, %v860
  %v862 = vsel %vm859, %v861, %v857
  %v863 = vmul.f32 1.0, %v862
  %v864 = vrcp.pop %v750
  %v865 = vmul.f32 %v750, %v864
  %v866 = vsub.f32 1.0, %v865
  %v867 = vmul.f32 %v864, %v866
  %v868 = vadd.f32 %v864, %v867
  %vm869 = vweird.f32 %v750
  %vm870 = vweird.f32 %v864
  %vm871 = vmor %vm869, %vm870
  %v872 = vsel %vm871, %v864, %v868
  %v873 = vand.u32 2147483647, %v750
  %vm874 = vcmp.eq.f32.partialorder %v873, 8.507059e+37
  %v875 = vand.u32 %v750, 2147483648
  %v876 = vor.u32 1.1754944e-38, %v875
  %v877 = vsel %vm874, %v876, %v872
  %v878 = vmul.f32 1.0, %v877
  %v879 = vrcp.pop %v751
  %v880 = vmul.f32 %v751, %v879
  %v881 = vsub.f32 1.0, %v880
  %v882 = vmul.f32 %v879, %v881
  %v883 = vadd.f32 %v879, %v882
  %vm884 = vweird.f32 %v751
  %vm885 = vweird.f32 %v879
  %vm886 = vmor %vm884, %vm885
  %v887 = vsel %vm886, %v879, %v883
  %v888 = vand.u32 2147483647, %v751
  %vm889 = vcmp.eq.f32.partialorder %v888, 8.507059e+37
  %v890 = vand.u32 %v751, 2147483648
  %v891 = vor.u32 1.1754944e-38, %v890
  %v892 = vsel %vm889, %v891, %v887
  %v893 = vmul.f32 1.0, %v892
  %v894 = vrcp.pop %v752
  %v895 = vmul.f32 %v752, %v894
  %v896 = vsub.f32 1.0, %v895
  %v897 = vmul.f32 %v894, %v896
  %v898 = vadd.f32 %v894, %v897
  %vm899 = vweird.f32 %v752
  %vm900 = vweird.f32 %v894
  %vm901 = vmor %vm899, %vm900
  %v902 = vsel %vm901, %v894, %v898
  %v903 = vand.u32 2147483647, %v752
  %vm904 = vcmp.eq.f32.partialorder %v903, 8.507059e+37
  %v905 = vand.u32 %v752, 2147483648
  %v906 = vor.u32 1.1754944e-38, %v905
  %v907 = vsel %vm904, %v906, %v902
  %v908 = vmul.f32 1.0, %v907
  %v909 = vrcp.pop %v753
  %v910 = vmul.f32 %v753, %v909
  %v911 = vsub.f32 1.0, %v910
  %v912 = vmul.f32 %v909, %v911
  %v913 = vadd.f32 %v909, %v912
  %vm914 = vweird.f32 %v753
  %vm915 = vweird.f32 %v909
  %vm916 = vmor %vm914, %vm915
  %v917 = vsel %vm916, %v909, %v913
  %v918 = vand.u32 2147483647, %v753
  %vm919 = vcmp.eq.f32.partialorder %v918, 8.507059e+37
  %v920 = vand.u32 %v753, 2147483648
  %v921 = vor.u32 1.1754944e-38, %v920
  %v922 = vsel %vm919, %v921, %v917
  %v923 = vmul.f32 1.0, %v922
  %v924 = vrcp.pop %v754
  %v925 = vmul.f32 %v754, %v924
  %v926 = vsub.f32 1.0, %v925
  %v927 = vmul.f32 %v924, %v926
  %v928 = vadd.f32 %v924, %v927
  %vm929 = vweird.f32 %v754
  %vm930 = vweird.f32 %v924
  %vm931 = vmor %vm929, %vm930
  %v932 = vsel %vm931, %v924, %v928
  %v933 = vand.u32 2147483647, %v754
  %vm934 = vcmp.eq.f32.partialorder %v933, 8.507059e+37
  %v935 = vand.u32 %v754, 2147483648
  %v936 = vor.u32 1.1754944e-38, %v935
  %v937 = vsel %vm934, %v936, %v932
  %v938 = vmul.f32 1.0, %v937
  %v939 = vrcp.pop %v755
  %v940 = vmul.f32 %v755, %v939
  %v941 = vsub.f32 1.0, %v940
  %v942 = vmul.f32 %v939, %v941
  %v943 = vadd.f32 %v939, %v942
  %vm944 = vweird.f32 %v755
  %vm945 = vweird.f32 %v939
  %vm946 = vmor %vm944, %vm945
  %v947 = vsel %vm946, %v939, %v943
  %v948 = vand.u32 2147483647, %v755
  %vm949 = vcmp.eq.f32.partialorder %v948, 8.507059e+37
  %v950 = vand.u32 %v755, 2147483648
  %v951 = vor.u32 1.1754944e-38, %v950
  %v952 = vsel %vm949, %v951, %v947
  %v953 = vmul.f32 1.0, %v952
  %v954 = vrcp.pop %v756
  %v955 = vmul.f32 %v756, %v954
  %v956 = vsub.f32 1.0, %v955
  %v957 = vmul.f32 %v954, %v956
  %v958 = vadd.f32 %v954, %v957
  %vm959 = vweird.f32 %v756
  %vm960 = vweird.f32 %v954
  %vm961 = vmor %vm959, %vm960
  %v962 = vsel %vm961, %v954, %v958
  %v963 = vand.u32 2147483647, %v756
  %vm964 = vcmp.eq.f32.partialorder %v963, 8.507059e+37
  %v965 = vand.u32 %v756, 2147483648
  %v966 = vor.u32 1.1754944e-38, %v965
  %v967 = vsel %vm964, %v966, %v962
  %v968 = vmul.f32 1.0, %v967
  %v969 = vrcp.pop %v757
  %v970 = vmul.f32 %v757, %v969
  %v971 = vsub.f32 1.0, %v970
  %v972 = vmul.f32 %v969, %v971
  %v973 = vadd.f32 %v969, %v972
  %vm974 = vweird.f32 %v757
  %vm975 = vweird.f32 %v969
  %vm976 = vmor %vm974, %vm975
  %v977 = vsel %vm976, %v969, %v973
  %v978 = vand.u32 2147483647, %v757
  %vm979 = vcmp.eq.f32.partialorder %v978, 8.507059e+37
  %v980 = vand.u32 %v757, 2147483648
  %v981 = vor.u32 1.1754944e-38, %v980
  %v982 = vsel %vm979, %v981, %v977
  %v983 = vmul.f32 1.0, %v982
  %v984 = vrcp.pop %v758
  %v985 = vmul.f32 %v758, %v984
  %v986 = vsub.f32 1.0, %v985
  %v987 = vmul.f32 %v984, %v986
  %v988 = vadd.f32 %v984, %v987
  %vm989 = vweird.f32 %v758
  %vm990 = vweird.f32 %v984
  %vm991 = vmor %vm989, %vm990
  %v992 = vsel %vm991, %v984, %v988
  %v993 = vand.u32 2147483647, %v758
  %vm994 = vcmp.eq.f32.partialorder %v993, 8.507059e+37
  %v995 = vand.u32 %v758, 2147483648
  %v996 = vor.u32 1.1754944e-38, %v995
  %v997 = vsel %vm994, %v996, %v992
  %v998 = vmul.f32 1.0, %v997
  %v999 = vmul.f32 %v679, %v773
  %v1000 = vmul.f32 %v680, %v788
  %v1001 = vmul.f32 %v681, %v803
  %v1002 = vmul.f32 %v682, %v818
  %v1003 = vmul.f32 %v683, %v833
  %v1004 = vmul.f32 %v684, %v848
  %v1005 = vmul.f32 %v685, %v863
  %v1006 = vmul.f32 %v686, %v878
  %v1007 = vmul.f32 %v687, %v893
  %v1008 = vmul.f32 %v688, %v908
  %v1009 = vmul.f32 %v689, %v923
  %v1010 = vmul.f32 %v690, %v938
  %v1011 = vmul.f32 %v691, %v953
  %v1012 = vmul.f32 %v692, %v968
  %v1013 = vmul.f32 %v693, %v983
  %v1014 = vmul.f32 %v694, %v998
  %v1015 = vpack.c.bf16 %v999, %v999
  %v1016 = vpack.c.bf16 %v1000, %v1000
  %v1017 = vpack.c.bf16 %v1001, %v1001
  %v1018 = vpack.c.bf16 %v1002, %v1002
  %v1019 = vpack.c.bf16 %v1003, %v1003
  %v1020 = vpack.c.bf16 %v1004, %v1004
  %v1021 = vpack.c.bf16 %v1005, %v1005
  %v1022 = vpack.c.bf16 %v1006, %v1006
  %v1023 = vpack.c.bf16 %v1007, %v1007
  %v1024 = vpack.c.bf16 %v1008, %v1008
  %v1025 = vpack.c.bf16 %v1009, %v1009
  %v1026 = vpack.c.bf16 %v1010, %v1010
  %v1027 = vpack.c.bf16 %v1011, %v1011
  %v1028 = vpack.c.bf16 %v1012, %v1012
  %v1029 = vpack.c.bf16 %v1013, %v1013
  %v1030 = vpack.c.bf16 %v1014, %v1014
  %1031 = vst [vmem:[%s8] sm:$0xf] %v1015
  %1032 = vst [vmem:[%s8 + $0x4] sm:$0xf] %v1016
  %1033 = vst [vmem:[%s8 + $0x8] sm:$0xf] %v1017
  %1034 = vst [vmem:[%s8 + $0xc] sm:$0xf] %v1018
  %1035 = vst [vmem:[%s8 + $0x10] sm:$0xf] %v1019
  %1036 = vst [vmem:[%s8 + $0x14] sm:$0xf] %v1020
  %1037 = vst [vmem:[%s8 + $0x18] sm:$0xf] %v1021
  %1038 = vst [vmem:[%s8 + $0x1c] sm:$0xf] %v1022
  %1039 = vst [vmem:[%s8 + $0x20] sm:$0xf] %v1023
  %1040 = vst [vmem:[%s8 + $0x24] sm:$0xf] %v1024
  %1041 = vst [vmem:[%s8 + $0x28] sm:$0xf] %v1025
  %1042 = vst [vmem:[%s8 + $0x2c] sm:$0xf] %v1026
  %1043 = vst [vmem:[%s8 + $0x30] sm:$0xf] %v1027
  %1044 = vst [vmem:[%s8 + $0x34] sm:$0xf] %v1028
  %1045 = vst [vmem:[%s8 + $0x38] sm:$0xf] %v1029
  %1046 = vst [vmem:[%s8 + $0x3c] sm:$0xf] %v1030
  // Predicated region
  $region30: #{efficientnet_features.2} parent=0 // pred_check
    _
  $region31: #{efficientnet_features.2} parent=0 // pred_check_branch
    %1048 = sbr.rel (0) target = $region33
  $region32: #{efficientnet_features.2} parent=0 // pred_region
    _
  $region33: #{efficientnet_features.2} parent=0 // pred_fallthru
    _
  // Predicated region
  $region34: #{efficientnet_features.2} parent=0 // pred_check
    _
  $region35: #{efficientnet_features.2} parent=0 // pred_check_branch
    %1050 = sbr.rel (0) target = $region37
  $region36: #{efficientnet_features.2} parent=0 // pred_region
    _
  $region37: #{efficientnet_features.2} parent=0 // pred_fallthru
    _
  // Predicated region
  $region38: #{efficientnet_features.2} parent=0 // pred_check
    _
  $region39: #{efficientnet_features.2} parent=0 // pred_check_branch
    %1052 = sbr.rel (0) target = $region41
  $region40: #{efficientnet_features.2} parent=0 // pred_region
    _
  $region41: #{efficientnet_features.2} parent=0 // pred_fallthru
    _
  // Predicated region
  $region42: #{efficientnet_features.2} parent=0 // pred_check
    _
  $region43: #{efficientnet_features.2} parent=0 // pred_check_branch
    %1054 = sbr.rel (0) target = $region45
  $region44: #{efficientnet_features.2} parent=0 // pred_region
    _
  $region45: #{efficientnet_features.2} parent=0 // pred_fallthru
    _

// kernel: efficientnet_features.3
$region0: #{efficientnet_features.3}
  #allocation0 [shape = 'u32[]', space=smem, size = 0x4, offset = 0x4, fixed_abs, tag = 'smem constant byte address 0x4 - core index']
  #allocation1 [shape = 'u32[72,128]{1,0:T(1,128)}', space=vmem, size = 0x9000, scoped, tag = 'internal scratch']
  %s0 = inlined_call_operand.vmem [shape: bf16[2,10,16,128], index: 0, kind: input, shape index: {}]
  %s1 = inlined_call_operand.vmem [shape: f32[2,64,32], index: 1, kind: input, shape index: {}]
  %s2 = inlined_call_operand.vmem [shape: f32[9,128], index: 2, kind: input, shape index: {}]
  %s3 = inlined_call_operand.vmem [shape: f32[1,128], index: 3, kind: input, shape index: {}]
  %s4 = inlined_call_operand.vmem [shape: f32[1,128], index: 4, kind: input, shape index: {}]
  %s5 = inlined_call_operand.vmem [shape: bf16[128,128], index: 5, kind: input, shape index: {}]
  %s6 = inlined_call_operand.vmem [shape: f32[1,128], index: 6, kind: input, shape index: {}]
  %s7 = inlined_call_operand.vmem [shape: bf16[128,128], index: 7, kind: input, shape index: {}]
  %s8 = inlined_call_operand.vmem [shape: f32[1,128], index: 8, kind: input, shape index: {}]
  %s9 = inlined_call_operand.vmem [shape: bf16[128,32], index: 9, kind: input, shape index: {}]
  %s10 = inlined_call_operand.vmem [shape: f32[1,32], index: 10, kind: input, shape index: {}]
  %s11 = inlined_call_operand.vmem [shape: f32[1,32], index: 11, kind: input, shape index: {}]
  %s12 = inlined_call_operand.vmem [shape: bf16[32,128], index: 12, kind: input, shape index: {}]
  %s13 = inlined_call_operand.vmem [shape: f32[1,128], index: 13, kind: input, shape index: {}]
  %s14 = inlined_call_operand.vmem [shape: f32[1,128], index: 14, kind: input, shape index: {}]
  %s15 = inlined_call_operand.vmem [shape: f32[2,64,128], index: 15, kind: output, shape index: {}]
  %s16 = sld [smem:[#allocation0]]
  $region93: #{efficientnet_features.3} parent=0
    _
  %s18 = ssub.s32 1, %s16
  %s19 = scalar_select 0, %s18, %s16
  loop: start=0, step=1, limit=4
  $region2: #{efficientnet_features.3} parent=0 // loop_pre_header
    _
  $region3: #{efficientnet_features.3} parent=0 // loop_header
    %s21 = sphi 0, %s25
    %p22 = scmp.ge.s32.totalorder %s21, 4
    %s31 = sphi 0, %s33
    %s34 = sphi 0, %s31
    %s35 = sphi 0, %s34
    %s51 = sphi 0, %s35
    %s57 = sphi 0, %s59
    %s60 = sphi 0, %s57
    %s61 = sphi 0, %s60
    %s77 = sphi 0, %s61
    %s81 = sphi 0, %s81
    %s83 = sphi 0, %s81
    %s84 = sphi 0, %s83
    %s98 = sphi 0, %s84
    %s102 = sphi 0, %s102
    %s104 = sphi 0, %s102
    %s105 = sphi 0, %s104
    %s119 = sphi 0, %s105
    %s123 = sphi 0, %s123
    %s125 = sphi 0, %s123
    %s126 = sphi 0, %s125
    %s140 = sphi 0, %s126
    %s144 = sphi 0, %s144
    %s146 = sphi 0, %s144
    %s147 = sphi 0, %s146
    %s161 = sphi 0, %s147
    %s165 = sphi 0, %s165
    %s167 = sphi 0, %s165
    %s168 = sphi 0, %s167
    %s182 = sphi 0, %s168
    %s186 = sphi 0, %s186
    %s188 = sphi 0, %s186
    %s189 = sphi 0, %s188
    %s203 = sphi 0, %s189
    %s207 = sphi 0, %s207
    %s209 = sphi 0, %s207
    %s210 = sphi 0, %s209
    %s224 = sphi 0, %s210
    %s228 = sphi 0, %s228
    %s230 = sphi 0, %s228
    %s231 = sphi 0, %s230
    %s245 = sphi 0, %s231
    %s249 = sphi 0, %s249
    %s251 = sphi 0, %s249
    %s252 = sphi 0, %s251
    %s266 = sphi 0, %s252
    %s270 = sphi 0, %s270
    %s272 = sphi 0, %s270
    %s273 = sphi 0, %s272
    %s287 = sphi 0, %s273
    %s291 = sphi 0, %s291
    %s293 = sphi 0, %s291
    %s294 = sphi 0, %s293
    %s308 = sphi 0, %s294
    %s312 = sphi 0, %s312
    %s314 = sphi 0, %s312
    %s315 = sphi 0, %s314
    %s329 = sphi 0, %s315
    %s333 = sphi 0, %s333
    %s335 = sphi 0, %s333
    %s336 = sphi 0, %s335
    %s350 = sphi 0, %s336
    %s356 = sphi 0, %s358
    %s359 = sphi 0, %s356
    %s360 = sphi 0, %s359
    %s376 = sphi 0, %s360
  $region4: #{efficientnet_features.3} parent=0 // loop_header_branch
    %24 = sbr.rel (%p22) target = $region8
  $region5: #{efficientnet_features.3} parent=0 // loop_body
    %s26 = ssub.s32 %s21, 1
    %s27 = ssub.s32 %s21, 2
    %s28 = sadd.s32 %s21, 1
    %s29 = ssub.s32 %s21, %s28
    %p30 = scmp.eq.s32.totalorder %s29, 0
    %s32 = sadd.s32 %s31, 1
    %s33 = scalar_select %p30, %s31, %s32
    %p36 = pneg %p30
    %p37 = scmp.eq.s32.totalorder %s21, 1
    %p38 = por %p36, %p37
    %p39 = scmp.ne.s32.totalorder %s31, %s34
    %p40 = scmp.eq.s32.totalorder %s21, 0
    %p41 = por %p39, %p40
    %p42 = scmp.ne.s32.totalorder %s31, %s34
    %p43 = scmp.eq.s32.totalorder %s26, 1
    %p44 = por %p42, %p43
    %p45 = scmp.ne.s32.totalorder %s34, %s35
    %p46 = scmp.eq.s32.totalorder %s26, 0
    %p47 = por %p45, %p46
    %p48 = scmp.ne.s32.totalorder %s34, %s35
    %p49 = scmp.eq.s32.totalorder %s27, 1
    %p50 = por %p48, %p49
    %p52 = scmp.ne.s32.totalorder %s35, %s51
    %p53 = scmp.eq.s32.totalorder %s27, 0
    %p54 = por %p52, %p53
    %s55 = ssub.s32 %s21, %s28
    %p56 = scmp.eq.s32.totalorder %s55, 0
    %s58 = sadd.s32 %s57, 1
    %s59 = scalar_select %p56, %s57, %s58
    %p62 = pneg %p56
    %p63 = scmp.eq.s32.totalorder %s21, 1
    %p64 = por %p62, %p63
    %p65 = scmp.ne.s32.totalorder %s57, %s60
    %p66 = scmp.eq.s32.totalorder %s21, 0
    %p67 = por %p65, %p66
    %p68 = scmp.ne.s32.totalorder %s57, %s60
    %p69 = scmp.eq.s32.totalorder %s26, 1
    %p70 = por %p68, %p69
    %p71 = scmp.ne.s32.totalorder %s60, %s61
    %p72 = scmp.eq.s32.totalorder %s26, 0
    %p73 = por %p71, %p72
    %p74 = scmp.ne.s32.totalorder %s60, %s61
    %p75 = scmp.eq.s32.totalorder %s27, 1
    %p76 = por %p74, %p75
    %p78 = scmp.ne.s32.totalorder %s61, %s77
    %p79 = scmp.eq.s32.totalorder %s27, 0
    %p80 = por %p78, %p79
    %s82 = sadd.s32 %s81, 1
    %p85 = scmp.eq.s32.totalorder %s21, 1
    %p86 = scmp.ne.s32.totalorder %s81, %s83
    %p87 = scmp.eq.s32.totalorder %s21, 0
    %p88 = por %p86, %p87
    %p89 = scmp.ne.s32.totalorder %s81, %s83
    %p90 = scmp.eq.s32.totalorder %s26, 1
    %p91 = por %p89, %p90
    %p92 = scmp.ne.s32.totalorder %s83, %s84
    %p93 = scmp.eq.s32.totalorder %s26, 0
    %p94 = por %p92, %p93
    %p95 = scmp.ne.s32.totalorder %s83, %s84
    %p96 = scmp.eq.s32.totalorder %s27, 1
    %p97 = por %p95, %p96
    %p99 = scmp.ne.s32.totalorder %s84, %s98
    %p100 = scmp.eq.s32.totalorder %s27, 0
    %p101 = por %p99, %p100
    %s103 = sadd.s32 %s102, 1
    %p106 = scmp.eq.s32.totalorder %s21, 1
    %p107 = scmp.ne.s32.totalorder %s102, %s104
    %p108 = scmp.eq.s32.totalorder %s21, 0
    %p109 = por %p107, %p108
    %p110 = scmp.ne.s32.totalorder %s102, %s104
    %p111 = scmp.eq.s32.totalorder %s26, 1
    %p112 = por %p110, %p111
    %p113 = scmp.ne.s32.totalorder %s104, %s105
    %p114 = scmp.eq.s32.totalorder %s26, 0
    %p115 = por %p113, %p114
    %p116 = scmp.ne.s32.totalorder %s104, %s105
    %p117 = scmp.eq.s32.totalorder %s27, 1
    %p118 = por %p116, %p117
    %p120 = scmp.ne.s32.totalorder %s105, %s119
    %p121 = scmp.eq.s32.totalorder %s27, 0
    %p122 = por %p120, %p121
    %s124 = sadd.s32 %s123, 1
    %p127 = scmp.eq.s32.totalorder %s21, 1
    %p128 = scmp.ne.s32.totalorder %s123, %s125
    %p129 = scmp.eq.s32.totalorder %s21, 0
    %p130 = por %p128, %p129
    %p131 = scmp.ne.s32.totalorder %s123, %s125
    %p132 = scmp.eq.s32.totalorder %s26, 1
    %p133 = por %p131, %p132
    %p134 = scmp.ne.s32.totalorder %s125, %s126
    %p135 = scmp.eq.s32.totalorder %s26, 0
    %p136 = por %p134, %p135
    %p137 = scmp.ne.s32.totalorder %s125, %s126
    %p138 = scmp.eq.s32.totalorder %s27, 1
    %p139 = por %p137, %p138
    %p141 = scmp.ne.s32.totalorder %s126, %s140
    %p142 = scmp.eq.s32.totalorder %s27, 0
    %p143 = por %p141, %p142
    %s145 = sadd.s32 %s144, 1
    %p148 = scmp.eq.s32.totalorder %s21, 1
    %p149 = scmp.ne.s32.totalorder %s144, %s146
    %p150 = scmp.eq.s32.totalorder %s21, 0
    %p151 = por %p149, %p150
    %p152 = scmp.ne.s32.totalorder %s144, %s146
    %p153 = scmp.eq.s32.totalorder %s26, 1
    %p154 = por %p152, %p153
    %p155 = scmp.ne.s32.totalorder %s146, %s147
    %p156 = scmp.eq.s32.totalorder %s26, 0
    %p157 = por %p155, %p156
    %p158 = scmp.ne.s32.totalorder %s146, %s147
    %p159 = scmp.eq.s32.totalorder %s27, 1
    %p160 = por %p158, %p159
    %p162 = scmp.ne.s32.totalorder %s147, %s161
    %p163 = scmp.eq.s32.totalorder %s27, 0
    %p164 = por %p162, %p163
    %s166 = sadd.s32 %s165, 1
    %p169 = scmp.eq.s32.totalorder %s21, 1
    %p170 = scmp.ne.s32.totalorder %s165, %s167
    %p171 = scmp.eq.s32.totalorder %s21, 0
    %p172 = por %p170, %p171
    %p173 = scmp.ne.s32.totalorder %s165, %s167
    %p174 = scmp.eq.s32.totalorder %s26, 1
    %p175 = por %p173, %p174
    %p176 = scmp.ne.s32.totalorder %s167, %s168
    %p177 = scmp.eq.s32.totalorder %s26, 0
    %p178 = por %p176, %p177
    %p179 = scmp.ne.s32.totalorder %s167, %s168
    %p180 = scmp.eq.s32.totalorder %s27, 1
    %p181 = por %p179, %p180
    %p183 = scmp.ne.s32.totalorder %s168, %s182
    %p184 = scmp.eq.s32.totalorder %s27, 0
    %p185 = por %p183, %p184
    %s187 = sadd.s32 %s186, 1
    %p190 = scmp.eq.s32.totalorder %s21, 1
    %p191 = scmp.ne.s32.totalorder %s186, %s188
    %p192 = scmp.eq.s32.totalorder %s21, 0
    %p193 = por %p191, %p192
    %p194 = scmp.ne.s32.totalorder %s186, %s188
    %p195 = scmp.eq.s32.totalorder %s26, 1
    %p196 = por %p194, %p195
    %p197 = scmp.ne.s32.totalorder %s188, %s189
    %p198 = scmp.eq.s32.totalorder %s26, 0
    %p199 = por %p197, %p198
    %p200 = scmp.ne.s32.totalorder %s188, %s189
    %p201 = scmp.eq.s32.totalorder %s27, 1
    %p202 = por %p200, %p201
    %p204 = scmp.ne.s32.totalorder %s189, %s203
    %p205 = scmp.eq.s32.totalorder %s27, 0
    %p206 = por %p204, %p205
    %s208 = sadd.s32 %s207, 1
    %p211 = scmp.eq.s32.totalorder %s21, 1
    %p212 = scmp.ne.s32.totalorder %s207, %s209
    %p213 = scmp.eq.s32.totalorder %s21, 0
    %p214 = por %p212, %p213
    %p215 = scmp.ne.s32.totalorder %s207, %s209
    %p216 = scmp.eq.s32.totalorder %s26, 1
    %p217 = por %p215, %p216
    %p218 = scmp.ne.s32.totalorder %s209, %s210
    %p219 = scmp.eq.s32.totalorder %s26, 0
    %p220 = por %p218, %p219
    %p221 = scmp.ne.s32.totalorder %s209, %s210
    %p222 = scmp.eq.s32.totalorder %s27, 1
    %p223 = por %p221, %p222
    %p225 = scmp.ne.s32.totalorder %s210, %s224
    %p226 = scmp.eq.s32.totalorder %s27, 0
    %p227 = por %p225, %p226
    %s229 = sadd.s32 %s228, 1
    %p232 = scmp.eq.s32.totalorder %s21, 1
    %p233 = scmp.ne.s32.totalorder %s228, %s230
    %p234 = scmp.eq.s32.totalorder %s21, 0
    %p235 = por %p233, %p234
    %p236 = scmp.ne.s32.totalorder %s228, %s230
    %p237 = scmp.eq.s32.totalorder %s26, 1
    %p238 = por %p236, %p237
    %p239 = scmp.ne.s32.totalorder %s230, %s231
    %p240 = scmp.eq.s32.totalorder %s26, 0
    %p241 = por %p239, %p240
    %p242 = scmp.ne.s32.totalorder %s230, %s231
    %p243 = scmp.eq.s32.totalorder %s27, 1
    %p244 = por %p242, %p243
    %p246 = scmp.ne.s32.totalorder %s231, %s245
    %p247 = scmp.eq.s32.totalorder %s27, 0
    %p248 = por %p246, %p247
    %s250 = sadd.s32 %s249, 1
    %p253 = scmp.eq.s32.totalorder %s21, 1
    %p254 = scmp.ne.s32.totalorder %s249, %s251
    %p255 = scmp.eq.s32.totalorder %s21, 0
    %p256 = por %p254, %p255
    %p257 = scmp.ne.s32.totalorder %s249, %s251
    %p258 = scmp.eq.s32.totalorder %s26, 1
    %p259 = por %p257, %p258
    %p260 = scmp.ne.s32.totalorder %s251, %s252
    %p261 = scmp.eq.s32.totalorder %s26, 0
    %p262 = por %p260, %p261
    %p263 = scmp.ne.s32.totalorder %s251, %s252
    %p264 = scmp.eq.s32.totalorder %s27, 1
    %p265 = por %p263, %p264
    %p267 = scmp.ne.s32.totalorder %s252, %s266
    %p268 = scmp.eq.s32.totalorder %s27, 0
    %p269 = por %p267, %p268
    %s271 = sadd.s32 %s270, 1
    %p274 = scmp.eq.s32.totalorder %s21, 1
    %p275 = scmp.ne.s32.totalorder %s270, %s272
    %p276 = scmp.eq.s32.totalorder %s21, 0
    %p277 = por %p275, %p276
    %p278 = scmp.ne.s32.totalorder %s270, %s272
    %p279 = scmp.eq.s32.totalorder %s26, 1
    %p280 = por %p278, %p279
    %p281 = scmp.ne.s32.totalorder %s272, %s273
    %p282 = scmp.eq.s32.totalorder %s26, 0
    %p283 = por %p281, %p282
    %p284 = scmp.ne.s32.totalorder %s272, %s273
    %p285 = scmp.eq.s32.totalorder %s27, 1
    %p286 = por %p284, %p285
    %p288 = scmp.ne.s32.totalorder %s273, %s287
    %p289 = scmp.eq.s32.totalorder %s27, 0
    %p290 = por %p288, %p289
    %s292 = sadd.s32 %s291, 1
    %p295 = scmp.eq.s32.totalorder %s21, 1
    %p296 = scmp.ne.s32.totalorder %s291, %s293
    %p297 = scmp.eq.s32.totalorder %s21, 0
    %p298 = por %p296, %p297
    %p299 = scmp.ne.s32.totalorder %s291, %s293
    %p300 = scmp.eq.s32.totalorder %s26, 1
    %p301 = por %p299, %p300
    %p302 = scmp.ne.s32.totalorder %s293, %s294
    %p303 = scmp.eq.s32.totalorder %s26, 0
    %p304 = por %p302, %p303
    %p305 = scmp.ne.s32.totalorder %s293, %s294
    %p306 = scmp.eq.s32.totalorder %s27, 1
    %p307 = por %p305, %p306
    %p309 = scmp.ne.s32.totalorder %s294, %s308
    %p310 = scmp.eq.s32.totalorder %s27, 0
    %p311 = por %p309, %p310
    %s313 = sadd.s32 %s312, 1
    %p316 = scmp.eq.s32.totalorder %s21, 1
    %p317 = scmp.ne.s32.totalorder %s312, %s314
    %p318 = scmp.eq.s32.totalorder %s21, 0
    %p319 = por %p317, %p318
    %p320 = scmp.ne.s32.totalorder %s312, %s314
    %p321 = scmp.eq.s32.totalorder %s26, 1
    %p322 = por %p320, %p321
    %p323 = scmp.ne.s32.totalorder %s314, %s315
    %p324 = scmp.eq.s32.totalorder %s26, 0
    %p325 = por %p323, %p324
    %p326 = scmp.ne.s32.totalorder %s314, %s315
    %p327 = scmp.eq.s32.totalorder %s27, 1
    %p328 = por %p326, %p327
    %p330 = scmp.ne.s32.totalorder %s315, %s329
    %p331 = scmp.eq.s32.totalorder %s27, 0
    %p332 = por %p330, %p331
    %s334 = sadd.s32 %s333, 1
    %p337 = scmp.eq.s32.totalorder %s21, 1
    %p338 = scmp.ne.s32.totalorder %s333, %s335
    %p339 = scmp.eq.s32.totalorder %s21, 0
    %p340 = por %p338, %p339
    %p341 = scmp.ne.s32.totalorder %s333, %s335
    %p342 = scmp.eq.s32.totalorder %s26, 1
    %p343 = por %p341, %p342
    %p344 = scmp.ne.s32.totalorder %s335, %s336
    %p345 = scmp.eq.s32.totalorder %s26, 0
    %p346 = por %p344, %p345
    %p347 = scmp.ne.s32.totalorder %s335, %s336
    %p348 = scmp.eq.s32.totalorder %s27, 1
    %p349 = por %p347, %p348
    %p351 = scmp.ne.s32.totalorder %s336, %s350
    %p352 = scmp.eq.s32.totalorder %s27, 0
    %p353 = por %p351, %p352
    %s354 = ssub.s32 %s21, %s28
    %p355 = scmp.eq.s32.totalorder %s354, 0
    %s357 = sadd.s32 %s356, 1
    %s358 = scalar_select %p355, %s356, %s357
    %p361 = pneg %p355
    %p362 = scmp.eq.s32.totalorder %s21, 1
    %p363 = por %p361, %p362
    %p364 = scmp.ne.s32.totalorder %s356, %s359
    %p365 = scmp.eq.s32.totalorder %s21, 0
    %p366 = por %p364, %p365
    %p367 = scmp.ne.s32.totalorder %s356, %s359
    %p368 = scmp.eq.s32.totalorder %s26, 1
    %p369 = por %p367, %p368
    %p370 = scmp.ne.s32.totalorder %s359, %s360
    %p371 = scmp.eq.s32.totalorder %s26, 0
    %p372 = por %p370, %p371
    %p373 = scmp.ne.s32.totalorder %s359, %s360
    %p374 = scmp.eq.s32.totalorder %s27, 1
    %p375 = por %p373, %p374
    %p377 = scmp.ne.s32.totalorder %s360, %s376
    %p378 = scmp.eq.s32.totalorder %s27, 0
    %p379 = por %p377, %p378
    %p380 = scmp.le.s32.totalorder 1, %s21
    %p381 = scmp.lt.s32.totalorder %s21, 3
    %p382 = pnand %p380, %p381
    %p383 = pneg %p382
    // Predicated region
    $region9: #{efficientnet_features.3} parent=5 // pred_check
      _
    $region10: #{efficientnet_features.3} parent=5 // pred_check_branch
      %385 = sbr.rel (%p382) target = $region12
    $region11: #{efficientnet_features.3} parent=5 // pred_region
      %s386 = ssub.s32 %s21, 1
      // Predicated region
      $region13: #{efficientnet_features.3} parent=11 // pred_check
        %p387 = pneg %p94
      $region14: #{efficientnet_features.3} parent=11 // pred_check_branch
        %389 = sbr.rel (%p387) target = $region16
      $region15: #{efficientnet_features.3} parent=11 // pred_region
        _
      $region16: #{efficientnet_features.3} parent=11 // pred_fallthru
        _
      // Predicated region
      $region17: #{efficientnet_features.3} parent=11 // pred_check
        %p390 = pneg %p115
      $region18: #{efficientnet_features.3} parent=11 // pred_check_branch
        %392 = sbr.rel (%p390) target = $region20
      $region19: #{efficientnet_features.3} parent=11 // pred_region
        _
      $region20: #{efficientnet_features.3} parent=11 // pred_fallthru
        _
      // Predicated region
      $region21: #{efficientnet_features.3} parent=11 // pred_check
        %p393 = pneg %p136
      $region22: #{efficientnet_features.3} parent=11 // pred_check_branch
        %395 = sbr.rel (%p393) target = $region24
      $region23: #{efficientnet_features.3} parent=11 // pred_region
        _
      $region24: #{efficientnet_features.3} parent=11 // pred_fallthru
        _
      // Predicated region
      $region25: #{efficientnet_features.3} parent=11 // pred_check
        %p396 = pneg %p157
      $region26: #{efficientnet_features.3} parent=11 // pred_check_branch
        %398 = sbr.rel (%p396) target = $region28
      $region27: #{efficientnet_features.3} parent=11 // pred_region
        _
      $region28: #{efficientnet_features.3} parent=11 // pred_fallthru
        _
      // Predicated region
      $region29: #{efficientnet_features.3} parent=11 // pred_check
        %p399 = pneg %p178
      $region30: #{efficientnet_features.3} parent=11 // pred_check_branch
        %401 = sbr.rel (%p399) target = $region32
      $region31: #{efficientnet_features.3} parent=11 // pred_region
        _
      $region32: #{efficientnet_features.3} parent=11 // pred_fallthru
        _
      // Predicated region
      $region33: #{efficientnet_features.3} parent=11 // pred_check
        %p402 = pneg %p199
      $region34: #{efficientnet_features.3} parent=11 // pred_check_branch
        %404 = sbr.rel (%p402) target = $region36
      $region35: #{efficientnet_features.3} parent=11 // pred_region
        _
      $region36: #{efficientnet_features.3} parent=11 // pred_fallthru
        _
      // Predicated region
      $region37: #{efficientnet_features.3} parent=11 // pred_check
        %p405 = pneg %p220
      $region38: #{efficientnet_features.3} parent=11 // pred_check_branch
        %407 = sbr.rel (%p405) target = $region40
      $region39: #{efficientnet_features.3} parent=11 // pred_region
        _
      $region40: #{efficientnet_features.3} parent=11 // pred_fallthru
        _
      // Predicated region
      $region41: #{efficientnet_features.3} parent=11 // pred_check
        %p408 = pneg %p241
      $region42: #{efficientnet_features.3} parent=11 // pred_check_branch
        %410 = sbr.rel (%p408) target = $region44
      $region43: #{efficientnet_features.3} parent=11 // pred_region
        _
      $region44: #{efficientnet_features.3} parent=11 // pred_fallthru
        _
      // Predicated region
      $region45: #{efficientnet_features.3} parent=11 // pred_check
        %p411 = pneg %p262
      $region46: #{efficientnet_features.3} parent=11 // pred_check_branch
        %413 = sbr.rel (%p411) target = $region48
      $region47: #{efficientnet_features.3} parent=11 // pred_region
        _
      $region48: #{efficientnet_features.3} parent=11 // pred_fallthru
        _
      // Predicated region
      $region49: #{efficientnet_features.3} parent=11 // pred_check
        %p414 = pneg %p283
      $region50: #{efficientnet_features.3} parent=11 // pred_check_branch
        %416 = sbr.rel (%p414) target = $region52
      $region51: #{efficientnet_features.3} parent=11 // pred_region
        _
      $region52: #{efficientnet_features.3} parent=11 // pred_fallthru
        _
      // Predicated region
      $region53: #{efficientnet_features.3} parent=11 // pred_check
        %p417 = pneg %p304
      $region54: #{efficientnet_features.3} parent=11 // pred_check_branch
        %419 = sbr.rel (%p417) target = $region56
      $region55: #{efficientnet_features.3} parent=11 // pred_region
        _
      $region56: #{efficientnet_features.3} parent=11 // pred_fallthru
        _
      // Predicated region
      $region57: #{efficientnet_features.3} parent=11 // pred_check
        %p420 = pneg %p325
      $region58: #{efficientnet_features.3} parent=11 // pred_check_branch
        %422 = sbr.rel (%p420) target = $region60
      $region59: #{efficientnet_features.3} parent=11 // pred_region
        _
      $region60: #{efficientnet_features.3} parent=11 // pred_fallthru
        _
      // Predicated region
      $region61: #{efficientnet_features.3} parent=11 // pred_check
        %p423 = pneg %p346
      $region62: #{efficientnet_features.3} parent=11 // pred_check_branch
        %425 = sbr.rel (%p423) target = $region64
      $region63: #{efficientnet_features.3} parent=11 // pred_region
        _
      $region64: #{efficientnet_features.3} parent=11 // pred_fallthru
        _
    $region12: #{efficientnet_features.3} parent=5 // pred_fallthru
      _
    %p426 = scmp.lt.s32.totalorder %s21, 2
    // Predicated region
    $region65: #{efficientnet_features.3} parent=5 // pred_check
      %p427 = pneg %p426
    $region66: #{efficientnet_features.3} parent=5 // pred_check_branch
      %429 = sbr.rel (%p427) target = $region68
    $region67: #{efficientnet_features.3} parent=5 // pred_region
      // Predicated region
      $region69: #{efficientnet_features.3} parent=67 // pred_check
        %p430 = pneg %p41
      $region70: #{efficientnet_features.3} parent=67 // pred_check_branch
        %432 = sbr.rel (%p430) target = $region72
      $region71: #{efficientnet_features.3} parent=67 // pred_region
        %p433 = scmp.lt.s32.totalorder %s21, 1
        %s434 = scalar_select %p433, %s21, 1
        %s435 = smul.addr %s434, 20
        %s436 = smul.addr %s435, 4
        %s437 = scalar_lea.vmem %s0, %s436
      $region72: #{efficientnet_features.3} parent=67 // pred_fallthru
        _
      // Predicated region
      $region73: #{efficientnet_features.3} parent=67 // pred_check
        %p438 = pneg %p67
      $region74: #{efficientnet_features.3} parent=67 // pred_check_branch
        %440 = sbr.rel (%p438) target = $region76
      $region75: #{efficientnet_features.3} parent=67 // pred_region
        %p441 = scmp.lt.s32.totalorder %s21, 1
        %s442 = scalar_select %p441, %s21, 1
        %s443 = smul.addr %s442, 8
        %s444 = smul.addr %s443, 8
        %s445 = scalar_lea.vmem %s1, %s444
      $region76: #{efficientnet_features.3} parent=67 // pred_fallthru
        _
    $region68: #{efficientnet_features.3} parent=5 // pred_fallthru
      _
    %p446 = scmp.le.s32.totalorder 1, %s21
    %p447 = scmp.lt.s32.totalorder %s21, 3
    %p448 = pnand %p446, %p447
    %p449 = pneg %p448
    // Predicated region
    $region77: #{efficientnet_features.3} parent=5 // pred_check
      _
    $region78: #{efficientnet_features.3} parent=5 // pred_check_branch
      %451 = sbr.rel (%p448) target = $region80
    $region79: #{efficientnet_features.3} parent=5 // pred_region
      %s452 = ssub.s32 %s21, 1
      %p453 = scmp.lt.s32.totalorder %s26, 1
      %s454 = scalar_select %p453, %s26, 1
      %s455 = smul.addr %s454, 20
      %s456 = smul.addr %s455, 4
      %s457 = scalar_lea.vmem %s0, %s456
      %p458 = pneg %p47
      %p459 = pneg %p44
      %p460 = scmp.lt.s32.totalorder %s26, 1
      %s461 = scalar_select %p460, %s26, 1
      %s462 = smul.addr %s461, 8
      %s463 = smul.addr %s462, 8
      %s464 = scalar_lea.vmem %s1, %s463
      %p465 = pneg %p73
      %p466 = pneg %p70
      %p467 = pneg %p94
      %p468 = pneg %p91
      %p469 = pneg %p115
      %p470 = pneg %p112
      %p471 = pneg %p136
      %p472 = pneg %p133
      %p473 = pneg %p157
      %p474 = pneg %p154
      %p475 = pneg %p178
      %p476 = pneg %p175
      %p477 = pneg %p199
      %p478 = pneg %p196
      %p479 = pneg %p220
      %p480 = pneg %p217
      %p481 = pneg %p241
      %p482 = pneg %p238
      %p483 = pneg %p262
      %p484 = pneg %p259
      %p485 = pneg %p283
      %p486 = pneg %p280
      %p487 = pneg %p304
      %p488 = pneg %p301
      %p489 = pneg %p325
      %p490 = pneg %p322
      %p491 = pneg %p346
      %p492 = pneg %p343
      %p493 = pneg %p372
      %p494 = pneg %p369
      %p495 = scmp.lt.s32.totalorder %s26, 1
      %s496 = scalar_select %p495, %s26, 1
      %s497 = smul.addr %s496, 8
      %s498 = smul.addr %s497, 8
      %s499 = scalar_lea.vmem %s15, %s498
      %p500 = scmp.lt.s32.totalorder %s26, 1
      %s501 = scalar_select %p500, %s26, 1
      %s502 = smul.addr %s501, 20
      %s503 = smul.addr %s502, 4
      %s504 = scalar_lea.vmem %s0, %s503
      %p505 = scmp.lt.s32.totalorder %s26, 1
      %s506 = scalar_select %p505, %s26, 1
      %s507 = smul.addr %s506, 8
      %s508 = smul.addr %s507, 8
      %s509 = scalar_lea.vmem %s1, %s508
      %p510 = scmp.lt.s32.totalorder %s26, 1
      %s511 = scalar_select %p510, %s26, 1
      %s512 = smul.addr %s511, 8
      %s513 = smul.addr %s512, 8
      %s514 = scalar_lea.vmem %s15, %s513
      %v516 = vld [vmem:[%s504] sm:$0xf]
      %v517 = vld [vmem:[%s504 + $0x4] sm:$0xf]
      %v518 = vld [vmem:[%s504 + $0x8] sm:$0xf]
      %v519 = vld [vmem:[%s504 + $0xc] sm:$0xf]
      %v520 = vld [vmem:[%s504 + $0x10] sm:$0xf]
      %v521 = vld [vmem:[%s504 + $0x14] sm:$0xf]
      %v522 = vld [vmem:[%s504 + $0x18] sm:$0xf]
      %v523 = vld [vmem:[%s504 + $0x1c] sm:$0xf]
      %v524 = vld [vmem:[%s504 + $0x20] sm:$0xf]
      %v525 = vld [vmem:[%s504 + $0x24] sm:$0xf]
      %v526 = vld [vmem:[%s504 + $0x28] sm:$0xf]
      %v527 = vld [vmem:[%s504 + $0x2c] sm:$0xf]
      %v528 = vld [vmem:[%s504 + $0x30] sm:$0xf]
      %v529 = vld [vmem:[%s504 + $0x34] sm:$0xf]
      %v530 = vld [vmem:[%s504 + $0x38] sm:$0xf]
      %v531 = vld [vmem:[%s504 + $0x3c] sm:$0xf]
      %v532 = vld [vmem:[%s504 + $0x40] sm:$0xf]
      %v533 = vld [vmem:[%s504 + $0x44] sm:$0xf]
      %v534 = vld [vmem:[%s504 + $0x48] sm:$0xf]
      %v535 = vld [vmem:[%s504 + $0x4c] sm:$0xf]
      %v536 = vunpack.c.l.bf16 %v516
      %v537 = vunpack.c.l.bf16 %v517
      %v538 = vunpack.c.l.bf16 %v518
      %v539 = vunpack.c.l.bf16 %v519
      %v540 = vunpack.c.l.bf16 %v520
      %v541 = vunpack.c.l.bf16 %v521
      %v542 = vunpack.c.l.bf16 %v522
      %v543 = vunpack.c.l.bf16 %v523
      %v544 = vunpack.c.l.bf16 %v524
      %v545 = vunpack.c.l.bf16 %v525
      %v546 = vunpack.c.l.bf16 %v526
      %v547 = vunpack.c.l.bf16 %v527
      %v548 = vunpack.c.l.bf16 %v528
      %v549 = vunpack.c.l.bf16 %v529
      %v550 = vunpack.c.l.bf16 %v530
      %v551 = vunpack.c.l.bf16 %v531
      %v552 = vunpack.c.l.bf16 %v532
      %v553 = vunpack.c.l.bf16 %v533
      %v554 = vunpack.c.l.bf16 %v534
      %v555 = vunpack.c.l.bf16 %v535
      %v556 = vld [vmem:[%s2] sm:$0xff]
      %v557 = vld [vmem:[%s2 + $0x8] sm:$0x1]
      %v558 = vperm.slane %v556, 0
      %v559 = vmul.f32 %v536, %v558
      %v560 = vmul.f32 %v538, %v558
      %v561 = vmul.f32 %v540, %v558
      %v562 = vmul.f32 %v542, %v558
      %v563 = vmul.f32 %v544, %v558
      %v564 = vmul.f32 %v546, %v558
      %v565 = vmul.f32 %v548, %v558
      %v566 = vmul.f32 %v550, %v558
      %v567 = vadd.f32 %v559, 0.0
      %v568 = vadd.f32 %v560, 0.0
      %v569 = vadd.f32 %v561, 0.0
      %v570 = vadd.f32 %v562, 0.0
      %v571 = vadd.f32 %v563, 0.0
      %v572 = vadd.f32 %v564, 0.0
      %v573 = vadd.f32 %v565, 0.0
      %v574 = vadd.f32 %v566, 0.0
      %v575 = vperm.slane %v556, 3
      %v576 = vmul.f32 %v538, %v575
      %v577 = vmul.f32 %v540, %v575
      %v578 = vmul.f32 %v542, %v575
      %v579 = vmul.f32 %v544, %v575
      %v580 = vmul.f32 %v546, %v575
      %v581 = vmul.f32 %v548, %v575
      %v582 = vmul.f32 %v550, %v575
      %v583 = vmul.f32 %v552, %v575
      %v584 = vadd.f32 %v567, %v576
      %v585 = vadd.f32 %v568, %v577
      %v586 = vadd.f32 %v569, %v578
      %v587 = vadd.f32 %v570, %v579
      %v588 = vadd.f32 %v571, %v580
      %v589 = vadd.f32 %v572, %v581
      %v590 = vadd.f32 %v573, %v582
      %v591 = vadd.f32 %v574, %v583
      %v592 = vperm.slane %v556, 6
      %v593 = vmul.f32 %v540, %v592
      %v594 = vmul.f32 %v542, %v592
      %v595 = vmul.f32 %v544, %v592
      %v596 = vmul.f32 %v546, %v592
      %v597 = vmul.f32 %v548, %v592
      %v598 = vmul.f32 %v550, %v592
      %v599 = vmul.f32 %v552, %v592
      %v600 = vmul.f32 %v554, %v592
      %v601 = vadd.f32 %v584, %v593
      %v602 = vadd.f32 %v585, %v594
      %v603 = vadd.f32 %v586, %v595
      %v604 = vadd.f32 %v587, %v596
      %v605 = vadd.f32 %v588, %v597
      %v606 = vadd.f32 %v589, %v598
      %v607 = vadd.f32 %v590, %v599
      %v608 = vadd.f32 %v591, %v600
      %v609 = vrot.slane %v536, 1
      %v610 = vrot.slane %v538, 1
      %v611 = vrot.slane %v540, 1
      %v612 = vrot.slane %v542, 1
      %v613 = vrot.slane %v544, 1
      %v614 = vrot.slane %v546, 1
      %v615 = vrot.slane %v548, 1
      %v616 = vrot.slane %v550, 1
      %v617 = vrot.slane %v552, 1
      %v618 = vrot.slane %v554, 1
      %v619 = vrot.slane %v537, 1
      %v620 = vrot.slane %v539, 1
      %v621 = vrot.slane %v541, 1
      %v622 = vrot.slane %v543, 1
      %v623 = vrot.slane %v545, 1
      %v624 = vrot.slane %v547, 1
      %v625 = vrot.slane %v549, 1
      %v626 = vrot.slane %v551, 1
      %v627 = vrot.slane %v553, 1
      %v628 = vrot.slane %v555, 1
      %v629 = vlaneseq
      %v630 = vshrl.u32 %v629, 7
      %vm631 = vcmp.lt.s32.totalorder %v630, 7
      %v632 = vsel %vm631, %v609, %v619
      %v633 = vsel %vm631, %v610, %v620
      %v634 = vsel %vm631, %v611, %v621
      %v635 = vsel %vm631, %v612, %v622
      %v636 = vsel %vm631, %v613, %v623
      %v637 = vsel %vm631, %v614, %v624
      %v638 = vsel %vm631, %v615, %v625
      %v639 = vsel %vm631, %v616, %v626
      %v640 = vsel %vm631, %v617, %v627
      %v641 = vsel %vm631, %v618, %v628
      %v642 = vperm.slane %v556, 1
      %v643 = vmul.f32 %v632, %v642
      %v644 = vmul.f32 %v633, %v642
      %v645 = vmul.f32 %v634, %v642
      %v646 = vmul.f32 %v635, %v642
      %v647 = vmul.f32 %v636, %v642
      %v648 = vmul.f32 %v637, %v642
      %v649 = vmul.f32 %v638, %v642
      %v650 = vmul.f32 %v639, %v642
      %v651 = vadd.f32 %v601, %v643
      %v652 = vadd.f32 %v602, %v644
      %v653 = vadd.f32 %v603, %v645
      %v654 = vadd.f32 %v604, %v646
      %v655 = vadd.f32 %v605, %v647
      %v656 = vadd.f32 %v606, %v648
      %v657 = vadd.f32 %v607, %v649
      %v658 = vadd.f32 %v608, %v650
      %v659 = vperm.slane %v556, 4
      %v660 = vmul.f32 %v633, %v659
      %v661 = vmul.f32 %v634, %v659
      %v662 = vmul.f32 %v635, %v659
      %v663 = vmul.f32 %v636, %v659
      %v664 = vmul.f32 %v637, %v659
      %v665 = vmul.f32 %v638, %v659
      %v666 = vmul.f32 %v639, %v659
      %v667 = vmul.f32 %v640, %v659
      %v668 = vadd.f32 %v651, %v660
      %v669 = vadd.f32 %v652, %v661
      %v670 = vadd.f32 %v653, %v662
      %v671 = vadd.f32 %v654, %v663
      %v672 = vadd.f32 %v655, %v664
      %v673 = vadd.f32 %v656, %v665
      %v674 = vadd.f32 %v657, %v666
      %v675 = vadd.f32 %v658, %v667
      %v676 = vperm.slane %v556, 7
      %v677 = vmul.f32 %v634, %v676
      %v678 = vmul.f32 %v635, %v676
      %v679 = vmul.f32 %v636, %v676
      %v680 = vmul.f32 %v637, %v676
      %v681 = vmul.f32 %v638, %v676
      %v682 = vmul.f32 %v639, %v676
      %v683 = vmul.f32 %v640, %v676
      %v684 = vmul.f32 %v641, %v676
      %v685 = vadd.f32 %v668, %v677
      %v686 = vadd.f32 %v669, %v678
      %v687 = vadd.f32 %v670, %v679
      %v688 = vadd.f32 %v671, %v680
      %v689 = vadd.f32 %v672, %v681
      %v690 = vadd.f32 %v673, %v682
      %v691 = vadd.f32 %v674, %v683
      %v692 = vadd.f32 %v675, %v684
      %v693 = vrot.slane %v536, 2
      %v694 = vrot.slane %v538, 2
      %v695 = vrot.slane %v540, 2
      %v696 = vrot.slane %v542, 2
      %v697 = vrot.slane %v544, 2
      %v698 = vrot.slane %v546, 2
      %v699 = vrot.slane %v548, 2
      %v700 = vrot.slane %v550, 2
      %v701 = vrot.slane %v552, 2
      %v702 = vrot.slane %v554, 2
      %v703 = vrot.slane %v537, 2
      %v704 = vrot.slane %v539, 2
      %v705 = vrot.slane %v541, 2
      %v706 = vrot.slane %v543, 2
      %v707 = vrot.slane %v545, 2
      %v708 = vrot.slane %v547, 2
      %v709 = vrot.slane %v549, 2
      %v710 = vrot.slane %v551, 2
      %v711 = vrot.slane %v553, 2
      %v712 = vrot.slane %v555, 2
      %vm713 = vcmp.lt.s32.totalorder %v630, 6
      %v714 = vsel %vm713, %v693, %v703
      %v715 = vsel %vm713, %v694, %v704
      %v716 = vsel %vm713, %v695, %v705
      %v717 = vsel %vm713, %v696, %v706
      %v718 = vsel %vm713, %v697, %v707
      %v719 = vsel %vm713, %v698, %v708
      %v720 = vsel %vm713, %v699, %v709
      %v721 = vsel %vm713, %v700, %v710
      %v722 = vsel %vm713, %v701, %v711
      %v723 = vsel %vm713, %v702, %v712
      %v724 = vperm.slane %v556, 2
      %v725 = vmul.f32 %v714, %v724
      %v726 = vmul.f32 %v715, %v724
      %v727 = vmul.f32 %v716, %v724
      %v728 = vmul.f32 %v717, %v724
      %v729 = vmul.f32 %v718, %v724
      %v730 = vmul.f32 %v719, %v724
      %v731 = vmul.f32 %v720, %v724
      %v732 = vmul.f32 %v721, %v724
      %v733 = vadd.f32 %v685, %v725
      %v734 = vadd.f32 %v686, %v726
      %v735 = vadd.f32 %v687, %v727
      %v736 = vadd.f32 %v688, %v728
      %v737 = vadd.f32 %v689, %v729
      %v738 = vadd.f32 %v690, %v730
      %v739 = vadd.f32 %v691, %v731
      %v740 = vadd.f32 %v692, %v732
      %v741 = vperm.slane %v556, 5
      %v742 = vmul.f32 %v715, %v741
      %v743 = vmul.f32 %v716, %v741
      %v744 = vmul.f32 %v717, %v741
      %v745 = vmul.f32 %v718, %v741
      %v746 = vmul.f32 %v719, %v741
      %v747 = vmul.f32 %v720, %v741
      %v748 = vmul.f32 %v721, %v741
      %v749 = vmul.f32 %v722, %v741
      %v750 = vadd.f32 %v733, %v742
      %v751 = vadd.f32 %v734, %v743
      %v752 = vadd.f32 %v735, %v744
      %v753 = vadd.f32 %v736, %v745
      %v754 = vadd.f32 %v737, %v746
      %v755 = vadd.f32 %v738, %v747
      %v756 = vadd.f32 %v739, %v748
      %v757 = vadd.f32 %v740, %v749
      %v758 = vperm.slane %v557, 0
      %v759 = vmul.f32 %v716, %v758
      %v760 = vmul.f32 %v717, %v758
      %v761 = vmul.f32 %v718, %v758
      %v762 = vmul.f32 %v719, %v758
      %v763 = vmul.f32 %v720, %v758
      %v764 = vmul.f32 %v721, %v758
      %v765 = vmul.f32 %v722, %v758
      %v766 = vmul.f32 %v723, %v758
      %v767 = vadd.f32 %v750, %v759
      %v768 = vadd.f32 %v751, %v760
      %v769 = vadd.f32 %v752, %v761
      %v770 = vadd.f32 %v753, %v762
      %v771 = vadd.f32 %v754, %v763
      %v772 = vadd.f32 %v755, %v764
      %v773 = vadd.f32 %v756, %v765
      %v774 = vadd.f32 %v757, %v766
      %v775 = vld [vmem:[%s3] sm:$0x1]
      %v777 = vperm.slane %v775, 0
      %v779 = vmul.f32 %v767, %v777
      %v780 = vmul.f32 %v768, %v777
      %v781 = vmul.f32 %v769, %v777
      %v782 = vmul.f32 %v770, %v777
      %v783 = vmul.f32 %v771, %v777
      %v784 = vmul.f32 %v772, %v777
      %v785 = vmul.f32 %v773, %v777
      %v786 = vmul.f32 %v774, %v777
      %v787 = vld [vmem:[%s4] sm:$0x1]
      %v789 = vperm.slane %v787, 0
      %v791 = vadd.f32 %v779, %v789
      %v792 = vadd.f32 %v780, %v789
      %v793 = vadd.f32 %v781, %v789
      %v794 = vadd.f32 %v782, %v789
      %v795 = vadd.f32 %v783, %v789
      %v796 = vadd.f32 %v784, %v789
      %v797 = vadd.f32 %v785, %v789
      %v798 = vadd.f32 %v786, %v789
      %v799 = vxor.u32 %v791, 2147483648
      %v800 = vxor.u32 %v792, 2147483648
      %v801 = vxor.u32 %v793, 2147483648
      %v802 = vxor.u32 %v794, 2147483648
      %v803 = vxor.u32 %v795, 2147483648
      %v804 = vxor.u32 %v796, 2147483648
      %v805 = vxor.u32 %v797, 2147483648
      %v806 = vxor.u32 %v798, 2147483648
      %v807 = vmul.f32 %v799, 1.442695
      %v808 = vpow.pop %v807
      %v809 = vmul.f32 %v800, 1.442695
      %v810 = vpow.pop %v809
      %v811 = vmul.f32 %v801, 1.442695
      %v812 = vpow.pop %v811
      %v813 = vmul.f32 %v802, 1.442695
      %v814 = vpow.pop %v813
      %v815 = vmul.f32 %v803, 1.442695
      %v816 = vpow.pop %v815
      %v817 = vmul.f32 %v804, 1.442695
      %v818 = vpow.pop %v817
      %v819 = vmul.f32 %v805, 1.442695
      %v820 = vpow.pop %v819
      %v821 = vmul.f32 %v806, 1.442695
      %v822 = vpow.pop %v821
      %v823 = vadd.f32 %v808, 1.0
      %v824 = vadd.f32 %v810, 1.0
      %v825 = vadd.f32 %v812, 1.0
      %v826 = vadd.f32 %v814, 1.0
      %v827 = vadd.f32 %v816, 1.0
      %v828 = vadd.f32 %v818, 1.0
      %v829 = vadd.f32 %v820, 1.0
      %v830 = vadd.f32 %v822, 1.0
      %v831 = vrcp.pop %v823
      %v832 = vmul.f32 %v823, %v831
      %v833 = vsub.f32 1.0, %v832
      %v834 = vmul.f32 %v831, %v833
      %v835 = vadd.f32 %v831, %v834
      %vm836 = vweird.f32 %v823
      %vm837 = vweird.f32 %v831
      %vm838 = vmor %vm836, %vm837
      %v839 = vsel %vm838, %v831, %v835
      %v840 = vand.u32 2147483647, %v823
      %vm841 = vcmp.eq.f32.partialorder %v840, 8.507059e+37
      %v842 = vand.u32 %v823, 2147483648
      %v843 = vor.u32 1.1754944e-38, %v842
      %v844 = vsel %vm841, %v843, %v839
      %v845 = vmul.f32 1.0, %v844
      %v846 = vrcp.pop %v824
      %v847 = vmul.f32 %v824, %v846
      %v848 = vsub.f32 1.0, %v847
      %v849 = vmul.f32 %v846, %v848
      %v850 = vadd.f32 %v846, %v849
      %vm851 = vweird.f32 %v824
      %vm852 = vweird.f32 %v846
      %vm853 = vmor %vm851, %vm852
      %v854 = vsel %vm853, %v846, %v850
      %v855 = vand.u32 2147483647, %v824
      %vm856 = vcmp.eq.f32.partialorder %v855, 8.507059e+37
      %v857 = vand.u32 %v824, 2147483648
      %v858 = vor.u32 1.1754944e-38, %v857
      %v859 = vsel %vm856, %v858, %v854
      %v860 = vmul.f32 1.0, %v859
      %v861 = vrcp.pop %v825
      %v862 = vmul.f32 %v825, %v861
      %v863 = vsub.f32 1.0, %v862
      %v864 = vmul.f32 %v861, %v863
      %v865 = vadd.f32 %v861, %v864
      %vm866 = vweird.f32 %v825
      %vm867 = vweird.f32 %v861
      %vm868 = vmor %vm866, %vm867
      %v869 = vsel %vm868, %v861, %v865
      %v870 = vand.u32 2147483647, %v825
      %vm871 = vcmp.eq.f32.partialorder %v870, 8.507059e+37
      %v872 = vand.u32 %v825, 2147483648
      %v873 = vor.u32 1.1754944e-38, %v872
      %v874 = vsel %vm871, %v873, %v869
      %v875 = vmul.f32 1.0, %v874
      %v876 = vrcp.pop %v826
      %v877 = vmul.f32 %v826, %v876
      %v878 = vsub.f32 1.0, %v877
      %v879 = vmul.f32 %v876, %v878
      %v880 = vadd.f32 %v876, %v879
      %vm881 = vweird.f32 %v826
      %vm882 = vweird.f32 %v876
      %vm883 = vmor %vm881, %vm882
      %v884 = vsel %vm883, %v876, %v880
      %v885 = vand.u32 2147483647, %v826
      %vm886 = vcmp.eq.f32.partialorder %v885, 8.507059e+37
      %v887 = vand.u32 %v826, 2147483648
      %v888 = vor.u32 1.1754944e-38, %v887
      %v889 = vsel %vm886, %v888, %v884
      %v890 = vmul.f32 1.0, %v889
      %v891 = vrcp.pop %v827
      %v892 = vmul.f32 %v827, %v891
      %v893 = vsub.f32 1.0, %v892
      %v894 = vmul.f32 %v891, %v893
      %v895 = vadd.f32 %v891, %v894
      %vm896 = vweird.f32 %v827
      %vm897 = vweird.f32 %v891
      %vm898 = vmor %vm896, %vm897
      %v899 = vsel %vm898, %v891, %v895
      %v900 = vand.u32 2147483647, %v827
      %vm901 = vcmp.eq.f32.partialorder %v900, 8.507059e+37
      %v902 = vand.u32 %v827, 2147483648
      %v903 = vor.u32 1.1754944e-38, %v902
      %v904 = vsel %vm901, %v903, %v899
      %v905 = vmul.f32 1.0, %v904
      %v906 = vrcp.pop %v828
      %v907 = vmul.f32 %v828, %v906
      %v908 = vsub.f32 1.0, %v907
      %v909 = vmul.f32 %v906, %v908
      %v910 = vadd.f32 %v906, %v909
      %vm911 = vweird.f32 %v828
      %vm912 = vweird.f32 %v906
      %vm913 = vmor %vm911, %vm912
      %v914 = vsel %vm913, %v906, %v910
      %v915 = vand.u32 2147483647, %v828
      %vm916 = vcmp.eq.f32.partialorder %v915, 8.507059e+37
      %v917 = vand.u32 %v828, 2147483648
      %v918 = vor.u32 1.1754944e-38, %v917
      %v919 = vsel %vm916, %v918, %v914
      %v920 = vmul.f32 1.0, %v919
      %v921 = vrcp.pop %v829
      %v922 = vmul.f32 %v829, %v921
      %v923 = vsub.f32 1.0, %v922
      %v924 = vmul.f32 %v921, %v923
      %v925 = vadd.f32 %v921, %v924
      %vm926 = vweird.f32 %v829
      %vm927 = vweird.f32 %v921
      %vm928 = vmor %vm926, %vm927
      %v929 = vsel %vm928, %v921, %v925
      %v930 = vand.u32 2147483647, %v829
      %vm931 = vcmp.eq.f32.partialorder %v930, 8.507059e+37
      %v932 = vand.u32 %v829, 2147483648
      %v933 = vor.u32 1.1754944e-38, %v932
      %v934 = vsel %vm931, %v933, %v929
      %v935 = vmul.f32 1.0, %v934
      %v936 = vrcp.pop %v830
      %v937 = vmul.f32 %v830, %v936
      %v938 = vsub.f32 1.0, %v937
      %v939 = vmul.f32 %v936, %v938
      %v940 = vadd.f32 %v936, %v939
      %vm941 = vweird.f32 %v830
      %vm942 = vweird.f32 %v936
      %vm943 = vmor %vm941, %vm942
      %v944 = vsel %vm943, %v936, %v940
      %v945 = vand.u32 2147483647, %v830
      %vm946 = vcmp.eq.f32.partialorder %v945, 8.507059e+37
      %v947 = vand.u32 %v830, 2147483648
      %v948 = vor.u32 1.1754944e-38, %v947
      %v949 = vsel %vm946, %v948, %v944
      %v950 = vmul.f32 1.0, %v949
      %v951 = vmul.f32 %v791, %v845
      %v952 = vmul.f32 %v792, %v860
      %v953 = vmul.f32 %v793, %v875
      %v954 = vmul.f32 %v794, %v890
      %v955 = vmul.f32 %v795, %v905
      %v956 = vmul.f32 %v796, %v920
      %v957 = vmul.f32 %v797, %v935
      %v958 = vmul.f32 %v798, %v950
      %v959 = vadd.f32 %v951, %v952
      %v960 = vadd.f32 %v959, %v953
      %v961 = vadd.f32 %v960, %v954
      %v962 = vadd.f32 %v961, %v955
      %v963 = vadd.f32 %v962, %v956
      %v964 = vadd.f32 %v963, %v957
      %v965 = vadd.f32 %v964, %v958
      %v966 = vrot.slane %v965, 4
      %v967 = vadd.f32 %v965, %v966
      %v968 = vrot.slane %v967, 2
      %v969 = vadd.f32 %v967, %v968
      %v970 = vrot.slane %v969, 1
      %v971 = vadd.f32 %v969, %v970
      %v972 = vrcp.pop 64.0
      %v973 = vmul.f32 64.0, %v972
      %v974 = vsub.f32 1.0, %v973
      %v975 = vmul.f32 %v972, %v974
      %v976 = vadd.f32 %v972, %v975
      %vm977 = vweird.f32 %v972
      %v978 = vsel %vm977, %v972, %v976
      %v979 = vmul.f32 %v971, %v978
      %v980 = vpack.c.bf16 %v979, %v979
      %v981 = vld [vmem:[%s5] sm:$0xf]
      %v982 = vld [vmem:[%s5 + $0x4] sm:$0xf]
      %v983 = vld [vmem:[%s5 + $0x8] sm:$0xf]
      %v984 = vld [vmem:[%s5 + $0xc] sm:$0xf]
      %v985 = vld [vmem:[%s5 + $0x10] sm:$0xf]
      %v986 = vld [vmem:[%s5 + $0x14] sm:$0xf]
      %v987 = vld [vmem:[%s5 + $0x18] sm:$0xf]
      %v988 = vld [vmem:[%s5 + $0x1c] sm:$0xf]
      %v989 = vld [vmem:[%s5 + $0x20] sm:$0xf]
      %v990 = vld [vmem:[%s5 + $0x24] sm:$0xf]
      %v991 = vld [vmem:[%s5 + $0x28] sm:$0xf]
      %v992 = vld [vmem:[%s5 + $0x2c] sm:$0xf]
      %v993 = vld [vmem:[%s5 + $0x30] sm:$0xf]
      %v994 = vld [vmem:[%s5 + $0x34] sm:$0xf]
      %v995 = vld [vmem:[%s5 + $0x38] sm:$0xf]
      %v996 = vld [vmem:[%s5 + $0x3c] sm:$0xf]
      %v997 = vld [vmem:[%s6] sm:$0x1]
      %v1014 = vunpack.c.l.b16 %v981
      %v1015 = vunpack.c.l.b16 %v982
      %v1016 = vunpack.c.l.b16 %v983
      %v1017 = vunpack.c.l.b16 %v984
      %v1018 = vunpack.c.l.b16 %v985
      %v1019 = vunpack.c.l.b16 %v986
      %v1020 = vunpack.c.l.b16 %v987
      %v1021 = vunpack.c.l.b16 %v988
      %v1022 = vunpack.c.l.b16 %v989
      %v1023 = vunpack.c.l.b16 %v990
      %v1024 = vunpack.c.l.b16 %v991
      %v1025 = vunpack.c.l.b16 %v992
      %v1026 = vunpack.c.l.b16 %v993
      %v1027 = vunpack.c.l.b16 %v994
      %v1028 = vunpack.c.l.b16 %v995
      %v1029 = vunpack.c.l.b16 %v996
      %v1030 = vpack.c.b16 %v1015, %v1014
      %v1031 = vpack.c.b16 %v1017, %v1016
      %v1032 = vpack.c.b16 %v1019, %v1018
      %v1033 = vpack.c.b16 %v1021, %v1020
      %v1034 = vpack.c.b16 %v1023, %v1022
      %v1035 = vpack.c.b16 %v1025, %v1024
      %v1036 = vpack.c.b16 %v1027, %v1026
      %v1037 = vpack.c.b16 %v1029, %v1028
      %1046 = vmatpush.bf16.msra.mxu0 %v1037
      %1047 = vmatpush.bf16.msra.mxu0 %v1036
      %1048 = vmatpush.bf16.msra.mxu0 %v1035
      %1049 = vmatpush.bf16.msra.mxu0 %v1034
      %1050 = vmatpush.bf16.msra.mxu0 %v1033
      %1051 = vmatpush.bf16.msra.mxu0 %v1032
      %1052 = vmatpush.bf16.msra.mxu0 %v1031
      %1053 = vmatpush.bf16.msra.mxu0 %v1030
      %1054 = vmatmul.bf16.gmra.mxu0 %v980
      %v1055 = vpop.f32.mrf.mxu0
      %v1056 = vadd.f32 %v997, %v1055
      %v1057 = vpop.f32.mrf.mxu0
      %1058 = vdwg.mxu0
      %v1059 = vxor.u32 %v1056, 2147483648
      %v1060 = vmul.f32 %v1059, 1.442695
      %v1061 = vpow.pop %v1060
      %v1062 = vadd.f32 %v1061, 1.0
      %v1063 = vrcp.pop %v1062
      %v1064 = vmul.f32 %v1062, %v1063
      %v1065 = vsub.f32 1.0, %v1064
      %v1066 = vmul.f32 %v1063, %v1065
      %v1067 = vadd.f32 %v1063, %v1066
      %vm1068 = vweird.f32 %v1062
      %vm1069 = vweird.f32 %v1063
      %vm1070 = vmor %vm1068, %vm1069
      %v1071 = vsel %vm1070, %v1063, %v1067
      %v1072 = vand.u32 2147483647, %v1062
      %vm1073 = vcmp.eq.f32.partialorder %v1072, 8.507059e+37
      %v1074 = vand.u32 %v1062, 2147483648
      %v1075 = vor.u32 1.1754944e-38, %v1074
      %v1076 = vsel %vm1073, %v1075, %v1071
      %v1077 = vmul.f32 1.0, %v1076
      %v1078 = vmul.f32 %v1056, %v1077
      %v1079 = vpack.c.bf16 %v1078, %v1078
      %v1080 = vld [vmem:[%s7] sm:$0xf]
      %v1081 = vld [vmem:[%s7 + $0x4] sm:$0xf]
      %v1082 = vld [vmem:[%s7 + $0x8] sm:$0xf]
      %v1083 = vld [vmem:[%s7 + $0xc] sm:$0xf]
      %v1084 = vld [vmem:[%s7 + $0x10] sm:$0xf]
      %v1085 = vld [vmem:[%s7 + $0x14] sm:$0xf]
      %v1086 = vld [vmem:[%s7 + $0x18] sm:$0xf]
      %v1087 = vld [vmem:[%s7 + $0x1c] sm:$0xf]
      %v1088 = vld [vmem:[%s7 + $0x20] sm:$0xf]
      %v1089 = vld [vmem:[%s7 + $0x24] sm:$0xf]
      %v1090 = vld [vmem:[%s7 + $0x28] sm:$0xf]
      %v1091 = vld [vmem:[%s7 + $0x2c] sm:$0xf]
      %v1092 = vld [vmem:[%s7 + $0x30] sm:$0xf]
      %v1093 = vld [vmem:[%s7 + $0x34] sm:$0xf]
      %v1094 = vld [vmem:[%s7 + $0x38] sm:$0xf]
      %v1095 = vld [vmem:[%s7 + $0x3c] sm:$0xf]
      %v1096 = vld [vmem:[%s8] sm:$0x1]
      %v1113 = vunpack.c.l.b16 %v1080
      %v1114 = vunpack.c.l.b16 %v1081
      %v1115 = vunpack.c.l.b16 %v1082
      %v1116 = vunpack.c.l.b16 %v1083
      %v1117 = vunpack.c.l.b16 %v1084
      %v1118 = vunpack.c.l.b16 %v1085
      %v1119 = vunpack.c.l.b16 %v1086
      %v1120 = vunpack.c.l.b16 %v1087
      %v1121 = vunpack.c.l.b16 %v1088
      %v1122 = vunpack.c.l.b16 %v1089
      %v1123 = vunpack.c.l.b16 %v1090
      %v1124 = vunpack.c.l.b16 %v1091
      %v1125 = vunpack.c.l.b16 %v1092
      %v1126 = vunpack.c.l.b16 %v1093
      %v1127 = vunpack.c.l.b16 %v1094
      %v1128 = vunpack.c.l.b16 %v1095
      %v1129 = vpack.c.b16 %v1114, %v1113
      %v1130 = vpack.c.b16 %v1116, %v1115
      %v1131 = vpack.c.b16 %v1118, %v1117
      %v1132 = vpack.c.b16 %v1120, %v1119
      %v1133 = vpack.c.b16 %v1122, %v1121
      %v1134 = vpack.c.b16 %v1124, %v1123
      %v1135 = vpack.c.b16 %v1126, %v1125
      %v1136 = vpack.c.b16 %v1128, %v1127
      %1145 = vmatpush.bf16.msra.mxu0 %v1136
      %1146 = vmatpush.bf16.msra.mxu0 %v1135
      %1147 = vmatpush.bf16.msra.mxu0 %v1134
      %1148 = vmatpush.bf16.msra.mxu0 %v1133
      %1149 = vmatpush.bf16.msra.mxu0 %v1132
      %1150 = vmatpush.bf16.msra.mxu0 %v1131
      %1151 = vmatpush.bf16.msra.mxu0 %v1130
      %1152 = vmatpush.bf16.msra.mxu0 %v1129
      %1153 = vmatmul.bf16.gmra.mxu0 %v1079
      %v1154 = vpop.f32.mrf.mxu0
      %v1155 = vadd.f32 %v1096, %v1154
      %v1156 = vpop.f32.mrf.mxu0
      %1157 = vdwg.mxu0
      %v1158 = vxor.u32 %v1155, 2147483648
      %v1159 = vmul.f32 %v1158, 1.442695
      %v1160 = vpow.pop %v1159
      %v1161 = vadd.f32 %v1160, 1.0
      %v1162 = vrcp.pop %v1161
      %v1163 = vmul.f32 %v1161, %v1162
      %v1164 = vsub.f32 1.0, %v1163
      %v1165 = vmul.f32 %v1162, %v1164
      %v1166 = vadd.f32 %v1162, %v1165
      %vm1167 = vweird.f32 %v1161
      %vm1168 = vweird.f32 %v1162
      %vm1169 = vmor %vm1167, %vm1168
      %v1170 = vsel %vm1169, %v1162, %v1166
      %v1171 = vand.u32 2147483647, %v1161
      %vm1172 = vcmp.eq.f32.partialorder %v1171, 8.507059e+37
      %v1173 = vand.u32 %v1161, 2147483648
      %v1174 = vor.u32 1.1754944e-38, %v1173
      %v1175 = vsel %vm1172, %v1174, %v1170
      %v1176 = vmul.f32 1.0, %v1175
      %v1177 = vperm.slane %v1176, 0
      %v1178 = vmul.f32 %v951, %v1177
      %v1179 = vmul.f32 %v952, %v1177
      %v1180 = vmul.f32 %v953, %v1177
      %v1181 = vmul.f32 %v954, %v1177
      %v1182 = vmul.f32 %v955, %v1177
      %v1183 = vmul.f32 %v956, %v1177
      %v1184 = vmul.f32 %v957, %v1177
      %v1185 = vmul.f32 %v958, %v1177
      %v1186 = vpack.c.bf16 %v1179, %v1178
      %v1187 = vpack.c.bf16 %v1181, %v1180
      %v1188 = vpack.c.bf16 %v1183, %v1182
      %v1189 = vpack.c.bf16 %v1185, %v1184
      %v1190 = vld [vmem:[%s9] sm:$0xf]
      %v1191 = vld [vmem:[%s9 + $0x4] sm:$0xf]
      %v1192 = vld [vmem:[%s9 + $0x8] sm:$0xf]
      %v1193 = vld [vmem:[%s9 + $0xc] sm:$0xf]
      %v1194 = vld [vmem:[%s9 + $0x10] sm:$0xf]
      %v1195 = vld [vmem:[%s9 + $0x14] sm:$0xf]
      %v1196 = vld [vmem:[%s9 + $0x18] sm:$0xf]
      %v1197 = vld [vmem:[%s9 + $0x1c] sm:$0xf]
      %v1198 = vld [vmem:[%s9 + $0x20] sm:$0xf]
      %v1199 = vld [vmem:[%s9 + $0x24] sm:$0xf]
      %v1200 = vld [vmem:[%s9 + $0x28] sm:$0xf]
      %v1201 = vld [vmem:[%s9 + $0x2c] sm:$0xf]
      %v1202 = vld [vmem:[%s9 + $0x30] sm:$0xf]
      %v1203 = vld [vmem:[%s9 + $0x34] sm:$0xf]
      %v1204 = vld [vmem:[%s9 + $0x38] sm:$0xf]
      %v1205 = vld [vmem:[%s9 + $0x3c] sm:$0xf]
      %v1222 = vunpack.c.l.b16 %v1190
      %v1223 = vunpack.c.l.b16 %v1191
      %v1224 = vunpack.c.l.b16 %v1192
      %v1225 = vunpack.c.l.b16 %v1193
      %v1226 = vunpack.c.l.b16 %v1194
      %v1227 = vunpack.c.l.b16 %v1195
      %v1228 = vunpack.c.l.b16 %v1196
      %v1229 = vunpack.c.l.b16 %v1197
      %v1230 = vunpack.c.l.b16 %v1198
      %v1231 = vunpack.c.l.b16 %v1199
      %v1232 = vunpack.c.l.b16 %v1200
      %v1233 = vunpack.c.l.b16 %v1201
      %v1234 = vunpack.c.l.b16 %v1202
      %v1235 = vunpack.c.l.b16 %v1203
      %v1236 = vunpack.c.l.b16 %v1204
      %v1237 = vunpack.c.l.b16 %v1205
      %v1238 = vpack.c.b16 %v1223, %v1222
      %v1239 = vpack.c.b16 %v1225, %v1224
      %v1240 = vpack.c.b16 %v1227, %v1226
      %v1241 = vpack.c.b16 %v1229, %v1228
      %v1242 = vpack.c.b16 %v1231, %v1230
      %v1243 = vpack.c.b16 %v1233, %v1232
      %v1244 = vpack.c.b16 %v1235, %v1234
      %v1245 = vpack.c.b16 %v1237, %v1236
      %1254 = vmatpush.bf16.msra.mxu0 %v1245
      %1255 = vmatpush.bf16.msra.mxu0 %v1244
      %1256 = vmatpush.bf16.msra.mxu0 %v1243
      %1257 = vmatpush.bf16.msra.mxu0 %v1242
      %1258 = vmatpush.bf16.msra.mxu0 %v1241
      %1259 = vmatpush.bf16.msra.mxu0 %v1240
      %1260 = vmatpush.bf16.msra.mxu0 %v1239
      %1261 = vmatpush.bf16.msra.mxu0 %v1238
      %1262 = vmatmul.bf16.gmra.mxu0 %v1186
      %v1263 = vpop.f32.mrf.mxu0
      %v1264 = vadd.f32 0.0, %v1263
      %v1265 = vpop.f32.mrf.mxu0
      %v1266 = vadd.f32 0.0, %v1265
      %1267 = vmatmul.bf16.gmra.mxu0 %v1187
      %v1268 = vpop.f32.mrf.mxu0
      %v1269 = vadd.f32 0.0, %v1268
      %v1270 = vpop.f32.mrf.mxu0
      %v1271 = vadd.f32 0.0, %v1270
      %1272 = vmatmul.bf16.gmra.mxu0 %v1188
      %v1273 = vpop.f32.mrf.mxu0
      %v1274 = vadd.f32 0.0, %v1273
      %v1275 = vpop.f32.mrf.mxu0
      %v1276 = vadd.f32 0.0, %v1275
      %1277 = vmatmul.bf16.gmra.mxu0 %v1189
      %v1278 = vpop.f32.mrf.mxu0
      %v1279 = vadd.f32 0.0, %v1278
      %v1280 = vpop.f32.mrf.mxu0
      %v1281 = vadd.f32 0.0, %v1280
      %1282 = vdwg.mxu0
      %v1283 = vld [vmem:[%s10] sm:$0x1]
      %v1285 = vperm.slane %v1283, 0
      %v1287 = vmul.f32 %v1264, %v1285
      %v1288 = vmul.f32 %v1266, %v1285
      %v1289 = vmul.f32 %v1269, %v1285
      %v1290 = vmul.f32 %v1271, %v1285
      %v1291 = vmul.f32 %v1274, %v1285
      %v1292 = vmul.f32 %v1276, %v1285
      %v1293 = vmul.f32 %v1279, %v1285
      %v1294 = vmul.f32 %v1281, %v1285
      %v1295 = vld [vmem:[%s11] sm:$0x1]
      %v1297 = vperm.slane %v1295, 0
      %v1299 = vadd.f32 %v1287, %v1297
      %v1300 = vadd.f32 %v1288, %v1297
      %v1301 = vadd.f32 %v1289, %v1297
      %v1302 = vadd.f32 %v1290, %v1297
      %v1303 = vadd.f32 %v1291, %v1297
      %v1304 = vadd.f32 %v1292, %v1297
      %v1305 = vadd.f32 %v1293, %v1297
      %v1306 = vadd.f32 %v1294, %v1297
      %v1307 = vld [vmem:[%s509] sm:$0xff]
      %v1308 = vld [vmem:[%s509 + $0x8] sm:$0xff]
      %v1309 = vld [vmem:[%s509 + $0x10] sm:$0xff]
      %v1310 = vld [vmem:[%s509 + $0x18] sm:$0xff]
      %v1311 = vld [vmem:[%s509 + $0x20] sm:$0xff]
      %v1312 = vld [vmem:[%s509 + $0x28] sm:$0xff]
      %v1313 = vld [vmem:[%s509 + $0x30] sm:$0xff]
      %v1314 = vld [vmem:[%s509 + $0x38] sm:$0xff]
      %v1315 = vadd.f32 %v1299, %v1307
      %v1316 = vadd.f32 %v1300, %v1308
      %v1317 = vadd.f32 %v1301, %v1309
      %v1318 = vadd.f32 %v1302, %v1310
      %v1319 = vadd.f32 %v1303, %v1311
      %v1320 = vadd.f32 %v1304, %v1312
      %v1321 = vadd.f32 %v1305, %v1313
      %v1322 = vadd.f32 %v1306, %v1314
      %v1323 = vpack.c.bf16 %v1316, %v1315
      %v1324 = vpack.c.bf16 %v1318, %v1317
      %v1325 = vpack.c.bf16 %v1320, %v1319
      %v1326 = vpack.c.bf16 %v1322, %v1321
      %v1327 = vld [vmem:[%s12] sm:$0xf]
      %v1328 = vld [vmem:[%s12 + $0x4] sm:$0xf]
      %v1329 = vld [vmem:[%s12 + $0x8] sm:$0xf]
      %v1330 = vld [vmem:[%s12 + $0xc] sm:$0xf]
      %v1335 = vunpack.c.l.b16 %v1327
      %v1336 = vunpack.c.l.b16 %v1328
      %v1337 = vunpack.c.l.b16 %v1329
      %v1338 = vunpack.c.l.b16 %v1330
      %v1339 = vpack.c.b16 %v1336, %v1335
      %v1340 = vpack.c.b16 %v1338, %v1337
      %vm1343 = vcmask 261120
      %v1345 = vsel %vm1343, %v1323, 0
      %v1348 = vsel %vm1343, %v1324, 0
      %v1351 = vsel %vm1343, %v1325, 0
      %v1354 = vsel %vm1343, %v1326, 0
      %1356 = vmatpush.bf16.msra.mxu0 0
      %1357 = vmatpush.bf16.msra.mxu0 0
      %1358 = vmatpush.bf16.msra.mxu0 0
      %1359 = vmatpush.bf16.msra.mxu0 0
      %1360 = vmatpush.bf16.msra.mxu0 0
      %1361 = vmatpush.bf16.msra.mxu0 0
      %1362 = vmatpush.bf16.msra.mxu0 %v1340
      %1363 = vmatpush.bf16.msra.mxu0 %v1339
      %1364 = vmatmul.bf16.gmra.mxu0 %v1345
      %v1365 = vpop.f32.mrf.mxu0
      %v1366 = vadd.f32 0.0, %v1365
      %v1367 = vpop.f32.mrf.mxu0
      %v1368 = vadd.f32 0.0, %v1367
      %1369 = vmatmul.bf16.gmra.mxu0 %v1348
      %v1370 = vpop.f32.mrf.mxu0
      %v1371 = vadd.f32 0.0, %v1370
      %v1372 = vpop.f32.mrf.mxu0
      %v1373 = vadd.f32 0.0, %v1372
      %1374 = vmatmul.bf16.gmra.mxu0 %v1351
      %v1375 = vpop.f32.mrf.mxu0
      %v1376 = vadd.f32 0.0, %v1375
      %v1377 = vpop.f32.mrf.mxu0
      %v1378 = vadd.f32 0.0, %v1377
      %1379 = vmatmul.bf16.gmra.mxu0 %v1354
      %v1380 = vpop.f32.mrf.mxu0
      %v1381 = vadd.f32 0.0, %v1380
      %v1382 = vpop.f32.mrf.mxu0
      %v1383 = vadd.f32 0.0, %v1382
      %1384 = vdwg.mxu0
      %v1385 = vld [vmem:[%s13] sm:$0x1]
      %v1387 = vperm.slane %v1385, 0
      %v1389 = vmul.f32 %v1366, %v1387
      %v1390 = vmul.f32 %v1368, %v1387
      %v1391 = vmul.f32 %v1371, %v1387
      %v1392 = vmul.f32 %v1373, %v1387
      %v1393 = vmul.f32 %v1376, %v1387
      %v1394 = vmul.f32 %v1378, %v1387
      %v1395 = vmul.f32 %v1381, %v1387
      %v1396 = vmul.f32 %v1383, %v1387
      %v1397 = vld [vmem:[%s14] sm:$0x1]
      %v1399 = vperm.slane %v1397, 0
      %v1401 = vadd.f32 %v1389, %v1399
      %v1402 = vadd.f32 %v1390, %v1399
      %v1403 = vadd.f32 %v1391, %v1399
      %v1404 = vadd.f32 %v1392, %v1399
      %v1405 = vadd.f32 %v1393, %v1399
      %v1406 = vadd.f32 %v1394, %v1399
      %v1407 = vadd.f32 %v1395, %v1399
      %v1408 = vadd.f32 %v1396, %v1399
      %v1409 = vxor.u32 %v1401, 2147483648
      %v1410 = vxor.u32 %v1402, 2147483648
      %v1411 = vxor.u32 %v1403, 2147483648
      %v1412 = vxor.u32 %v1404, 2147483648
      %v1413 = vxor.u32 %v1405, 2147483648
      %v1414 = vxor.u32 %v1406, 2147483648
      %v1415 = vxor.u32 %v1407, 2147483648
      %v1416 = vxor.u32 %v1408, 2147483648
      %v1417 = vmul.f32 %v1409, 1.442695
      %v1418 = vpow.pop %v1417
      %v1419 = vmul.f32 %v1410, 1.442695
      %v1420 = vpow.pop %v1419
      %v1421 = vmul.f32 %v1411, 1.442695
      %v1422 = vpow.pop %v1421
      %v1423 = vmul.f32 %v1412, 1.442695
      %v1424 = vpow.pop %v1423
      %v1425 = vmul.f32 %v1413, 1.442695
      %v1426 = vpow.pop %v1425
      %v1427 = vmul.f32 %v1414, 1.442695
      %v1428 = vpow.pop %v1427
      %v1429 = vmul.f32 %v1415, 1.442695
      %v1430 = vpow.pop %v1429
      %v1431 = vmul.f32 %v1416, 1.442695
      %v1432 = vpow.pop %v1431
      %v1433 = vadd.f32 %v1418, 1.0
      %v1434 = vadd.f32 %v1420, 1.0
      %v1435 = vadd.f32 %v1422, 1.0
      %v1436 = vadd.f32 %v1424, 1.0
      %v1437 = vadd.f32 %v1426, 1.0
      %v1438 = vadd.f32 %v1428, 1.0
      %v1439 = vadd.f32 %v1430, 1.0
      %v1440 = vadd.f32 %v1432, 1.0
      %v1441 = vrcp.pop %v1433
      %v1442 = vmul.f32 %v1433, %v1441
      %v1443 = vsub.f32 1.0, %v1442
      %v1444 = vmul.f32 %v1441, %v1443
      %v1445 = vadd.f32 %v1441, %v1444
      %vm1446 = vweird.f32 %v1433
      %vm1447 = vweird.f32 %v1441
      %vm1448 = vmor %vm1446, %vm1447
      %v1449 = vsel %vm1448, %v1441, %v1445
      %v1450 = vand.u32 2147483647, %v1433
      %vm1451 = vcmp.eq.f32.partialorder %v1450, 8.507059e+37
      %v1452 = vand.u32 %v1433, 2147483648
      %v1453 = vor.u32 1.1754944e-38, %v1452
      %v1454 = vsel %vm1451, %v1453, %v1449
      %v1455 = vmul.f32 1.0, %v1454
      %v1456 = vrcp.pop %v1434
      %v1457 = vmul.f32 %v1434, %v1456
      %v1458 = vsub.f32 1.0, %v1457
      %v1459 = vmul.f32 %v1456, %v1458
      %v1460 = vadd.f32 %v1456, %v1459
      %vm1461 = vweird.f32 %v1434
      %vm1462 = vweird.f32 %v1456
      %vm1463 = vmor %vm1461, %vm1462
      %v1464 = vsel %vm1463, %v1456, %v1460
      %v1465 = vand.u32 2147483647, %v1434
      %vm1466 = vcmp.eq.f32.partialorder %v1465, 8.507059e+37
      %v1467 = vand.u32 %v1434, 2147483648
      %v1468 = vor.u32 1.1754944e-38, %v1467
      %v1469 = vsel %vm1466, %v1468, %v1464
      %v1470 = vmul.f32 1.0, %v1469
      %v1471 = vrcp.pop %v1435
      %v1472 = vmul.f32 %v1435, %v1471
      %v1473 = vsub.f32 1.0, %v1472
      %v1474 = vmul.f32 %v1471, %v1473
      %v1475 = vadd.f32 %v1471, %v1474
      %vm1476 = vweird.f32 %v1435
      %vm1477 = vweird.f32 %v1471
      %vm1478 = vmor %vm1476, %vm1477
      %v1479 = vsel %vm1478, %v1471, %v1475
      %v1480 = vand.u32 2147483647, %v1435
      %vm1481 = vcmp.eq.f32.partialorder %v1480, 8.507059e+37
      %v1482 = vand.u32 %v1435, 2147483648
      %v1483 = vor.u32 1.1754944e-38, %v1482
      %v1484 = vsel %vm1481, %v1483, %v1479
      %v1485 = vmul.f32 1.0, %v1484
      %v1486 = vrcp.pop %v1436
      %v1487 = vmul.f32 %v1436, %v1486
      %v1488 = vsub.f32 1.0, %v1487
      %v1489 = vmul.f32 %v1486, %v1488
      %v1490 = vadd.f32 %v1486, %v1489
      %vm1491 = vweird.f32 %v1436
      %vm1492 = vweird.f32 %v1486
      %vm1493 = vmor %vm1491, %vm1492
      %v1494 = vsel %vm1493, %v1486, %v1490
      %v1495 = vand.u32 2147483647, %v1436
      %vm1496 = vcmp.eq.f32.partialorder %v1495, 8.507059e+37
      %v1497 = vand.u32 %v1436, 2147483648
      %v1498 = vor.u32 1.1754944e-38, %v1497
      %v1499 = vsel %vm1496, %v1498, %v1494
      %v1500 = vmul.f32 1.0, %v1499
      %v1501 = vrcp.pop %v1437
      %v1502 = vmul.f32 %v1437, %v1501
      %v1503 = vsub.f32 1.0, %v1502
      %v1504 = vmul.f32 %v1501, %v1503
      %v1505 = vadd.f32 %v1501, %v1504
      %vm1506 = vweird.f32 %v1437
      %vm1507 = vweird.f32 %v1501
      %vm1508 = vmor %vm1506, %vm1507
      %v1509 = vsel %vm1508, %v1501, %v1505
      %v1510 = vand.u32 2147483647, %v1437
      %vm1511 = vcmp.eq.f32.partialorder %v1510, 8.507059e+37
      %v1512 = vand.u32 %v1437, 2147483648
      %v1513 = vor.u32 1.1754944e-38, %v1512
      %v1514 = vsel %vm1511, %v1513, %v1509
      %v1515 = vmul.f32 1.0, %v1514
      %v1516 = vrcp.pop %v1438
      %v1517 = vmul.f32 %v1438, %v1516
      %v1518 = vsub.f32 1.0, %v1517
      %v1519 = vmul.f32 %v1516, %v1518
      %v1520 = vadd.f32 %v1516, %v1519
      %vm1521 = vweird.f32 %v1438
      %vm1522 = vweird.f32 %v1516
      %vm1523 = vmor %vm1521, %vm1522
      %v1524 = vsel %vm1523, %v1516, %v1520
      %v1525 = vand.u32 2147483647, %v1438
      %vm1526 = vcmp.eq.f32.partialorder %v1525, 8.507059e+37
      %v1527 = vand.u32 %v1438, 2147483648
      %v1528 = vor.u32 1.1754944e-38, %v1527
      %v1529 = vsel %vm1526, %v1528, %v1524
      %v1530 = vmul.f32 1.0, %v1529
      %v1531 = vrcp.pop %v1439
      %v1532 = vmul.f32 %v1439, %v1531
      %v1533 = vsub.f32 1.0, %v1532
      %v1534 = vmul.f32 %v1531, %v1533
      %v1535 = vadd.f32 %v1531, %v1534
      %vm1536 = vweird.f32 %v1439
      %vm1537 = vweird.f32 %v1531
      %vm1538 = vmor %vm1536, %vm1537
      %v1539 = vsel %vm1538, %v1531, %v1535
      %v1540 = vand.u32 2147483647, %v1439
      %vm1541 = vcmp.eq.f32.partialorder %v1540, 8.507059e+37
      %v1542 = vand.u32 %v1439, 2147483648
      %v1543 = vor.u32 1.1754944e-38, %v1542
      %v1544 = vsel %vm1541, %v1543, %v1539
      %v1545 = vmul.f32 1.0, %v1544
      %v1546 = vrcp.pop %v1440
      %v1547 = vmul.f32 %v1440, %v1546
      %v1548 = vsub.f32 1.0, %v1547
      %v1549 = vmul.f32 %v1546, %v1548
      %v1550 = vadd.f32 %v1546, %v1549
      %vm1551 = vweird.f32 %v1440
      %vm1552 = vweird.f32 %v1546
      %vm1553 = vmor %vm1551, %vm1552
      %v1554 = vsel %vm1553, %v1546, %v1550
      %v1555 = vand.u32 2147483647, %v1440
      %vm1556 = vcmp.eq.f32.partialorder %v1555, 8.507059e+37
      %v1557 = vand.u32 %v1440, 2147483648
      %v1558 = vor.u32 1.1754944e-38, %v1557
      %v1559 = vsel %vm1556, %v1558, %v1554
      %v1560 = vmul.f32 1.0, %v1559
      %v1561 = vmul.f32 %v1401, %v1455
      %v1562 = vmul.f32 %v1402, %v1470
      %v1563 = vmul.f32 %v1403, %v1485
      %v1564 = vmul.f32 %v1404, %v1500
      %v1565 = vmul.f32 %v1405, %v1515
      %v1566 = vmul.f32 %v1406, %v1530
      %v1567 = vmul.f32 %v1407, %v1545
      %v1568 = vmul.f32 %v1408, %v1560
      %1569 = vst [vmem:[%s514] sm:$0xff] %v1561
      %1570 = vst [vmem:[%s514 + $0x8] sm:$0xff] %v1562
      %1571 = vst [vmem:[%s514 + $0x10] sm:$0xff] %v1563
      %1572 = vst [vmem:[%s514 + $0x18] sm:$0xff] %v1564
      %1573 = vst [vmem:[%s514 + $0x20] sm:$0xff] %v1565
      %1574 = vst [vmem:[%s514 + $0x28] sm:$0xff] %v1566
      %1575 = vst [vmem:[%s514 + $0x30] sm:$0xff] %v1567
      %1576 = vst [vmem:[%s514 + $0x38] sm:$0xff] %v1568
      %p1577 = scmp.lt.s32.totalorder %s26, 1
      %s1578 = scalar_select %p1577, %s26, 1
      %s1579 = smul.addr %s1578, 8
      %s1580 = smul.addr %s1579, 8
      %s1581 = scalar_lea.vmem %s15, %s1580
      // Predicated region
      $region81: #{efficientnet_features.3} parent=79 // pred_check
        %p1582 = pneg %p369
      $region82: #{efficientnet_features.3} parent=79 // pred_check_branch
        %1584 = sbr.rel (%p1582) target = $region84
      $region83: #{efficientnet_features.3} parent=79 // pred_region
        _
      $region84: #{efficientnet_features.3} parent=79 // pred_fallthru
        _
    $region80: #{efficientnet_features.3} parent=5 // pred_fallthru
      _
    %p1585 = scmp.le.s32.totalorder 2, %s21
    // Predicated region
    $region85: #{efficientnet_features.3} parent=5 // pred_check
      %p1586 = pneg %p1585
    $region86: #{efficientnet_features.3} parent=5 // pred_check_branch
      %1588 = sbr.rel (%p1586) target = $region88
    $region87: #{efficientnet_features.3} parent=5 // pred_region
      %s1589 = ssub.s32 %s21, 2
      // Predicated region
      $region89: #{efficientnet_features.3} parent=87 // pred_check
        %p1590 = pneg %p375
      $region90: #{efficientnet_features.3} parent=87 // pred_check_branch
        %1592 = sbr.rel (%p1590) target = $region92
      $region91: #{efficientnet_features.3} parent=87 // pred_region
        %p1593 = scmp.lt.s32.totalorder %s27, 1
        %s1594 = scalar_select %p1593, %s27, 1
        %s1595 = smul.addr %s1594, 8
        %s1596 = smul.addr %s1595, 8
        %s1597 = scalar_lea.vmem %s15, %s1596
      $region92: #{efficientnet_features.3} parent=87 // pred_fallthru
        _
    $region88: #{efficientnet_features.3} parent=5 // pred_fallthru
      _
  $region6: #{efficientnet_features.3} parent=0 // loop_footer
    %s25 = sadd.s32 1, %s21
  $region7: #{efficientnet_features.3} parent=0 // loop_footer_branch
    %20 = sbr.rel target = $region3
  $region8: #{efficientnet_features.3} parent=0 // loop_exit
    _

</llo_original>
